<compile_context>
chip_gen: v6e
topology: v6e:2x2x1
jax: 0.10.0
libtpu: 0.0.40
codegen_flags: <defaults>
</compile_context>

<pallas_src>
import jax
import jax.numpy as jnp
from jax.experimental import pallas as pl
from jax.experimental.pallas import tpu as pltpu


# ----------------------------------------------------------------------------
# Fused Block kernel (one image per grid step)
# ----------------------------------------------------------------------------
def _block_kernel(x_ref, a_ref, b_ref, ws_ref, su_ref, sd_ref,
                  b1_ref, bo_ref, o_ref):
    """Fused Block forward.

    x_ref : (H, W*Cin)          input slab, channels interleaved on lanes
    a_ref : (3, W*Cin, W*Cout)  sepconv1 tap matrices (dw1 * pw1 * bn1_scale)
    b_ref : (3, W*Cout, W*Cout) sepconv2 tap matrices (dw2 * pw2 * bn2_scale)
    ws_ref: (W*Cin, W*Cout)     skip 1x1 conv (bns_scale folded), block diagonal
    su_ref: (H, H)              row-shift matrix selecting row h-1 (ky=0 taps)
    sd_ref: (H, H)              row-shift matrix selecting row h+1 (ky=2 taps)
    b1_ref: (1, W*Cout)         bn1 shift, tiled across W
    bo_ref: (1, W*Cout)         bn2 shift + skip-bn shift, tiled across W
    o_ref : (H, W*Cout)         output slab
    """
    f32 = jnp.float32
    x = x_ref[...]
    su = su_ref[...]
    sd = sd_ref[...]

    # SeparableConv #1 + BN1 (scale folded, shift = b1) + ReLU
    t0 = jnp.dot(x, a_ref[0], preferred_element_type=f32)
    t1 = jnp.dot(x, a_ref[1], preferred_element_type=f32)
    t2 = jnp.dot(x, a_ref[2], preferred_element_type=f32)
    y1 = (jnp.dot(su, t0, preferred_element_type=f32) + t1
          + jnp.dot(sd, t2, preferred_element_type=f32) + b1_ref[...])
    y1 = jnp.maximum(y1, 0.0)

    # SeparableConv #2 + BN2 (scale folded)
    u0 = jnp.dot(y1, b_ref[0], preferred_element_type=f32)
    u1 = jnp.dot(y1, b_ref[1], preferred_element_type=f32)
    u2 = jnp.dot(y1, b_ref[2], preferred_element_type=f32)
    main = (jnp.dot(su, u0, preferred_element_type=f32) + u1
            + jnp.dot(sd, u2, preferred_element_type=f32))

    # skip 1x1 + BNskip (scale folded) + residual add + merged shifts
    o_ref[...] = (main
                  + jnp.dot(x, ws_ref[...], preferred_element_type=f32)
                  + bo_ref[...])


# ----------------------------------------------------------------------------
# Wrapper: layout glue + constant folding of the Block into tap matrices
# ----------------------------------------------------------------------------
def block_forward(x_nchw, p):
    n, cin, h, w = x_nchw.shape
    cout = p["w_pw1"].shape[1]
    f32 = jnp.float32

    # glue: NCHW -> lane-dense (N, H, W*Cin)
    x3 = jnp.transpose(x_nchw, (0, 2, 3, 1)).astype(f32).reshape(n, h, w * cin)

    # fold BN scales into the 1x1 conv weights
    w1s = p["w_pw1"] * p["bn1_scale"][None, :]    # (Cin, Cout)
    w2s = p["w_pw2"] * p["bn2_scale"][None, :]    # (Cout, Cout)
    wss = p["w_skip"] * p["bns_scale"][None, :]   # (Cin, Cout)

    # In the (H, W*C) layout a separable conv is
    #     out = sum_ky  S_ky @ (in @ A_ky)
    # where S_ky is an (H, H) row-shift matrix and A_ky a (W*Cin, W*Cout)
    # matrix carrying the three kx taps, the depthwise weights, the pointwise
    # weights and the folded BN scale.  Out-of-range taps vanish because the
    # shift matrices simply have no entry there (== SAME zero padding).
    def tap_matrices(w_dw, w_pw_scaled):
        c_in = w_dw.shape[-1]
        c_out = w_pw_scaled.shape[1]
        mats = []
        for ky in range(3):
            m = jnp.zeros((w * c_in, w * c_out), f32)
            for kx in range(3):
                q = jnp.eye(w, w, k=1 - kx, dtype=f32)   # W shift + edge zeroing
                m = m + jnp.kron(q, w_dw[ky, kx, :][:, None] * w_pw_scaled)
            mats.append(m)
        return jnp.stack(mats)                            # (3, W*c_in, W*c_out)

    a_stk = tap_matrices(p["w_dw1"], w1s)                 # (3, 64, 128)
    b_stk = tap_matrices(p["w_dw2"], w2s)                 # (3, 128, 128)
    ws_bd = jnp.kron(jnp.eye(w, dtype=f32), wss)          # (64, 128)
    s_up = jnp.eye(h, h, k=-1, dtype=f32)                 # selects row h-1 (ky=0)
    s_dn = jnp.eye(h, h, k=+1, dtype=f32)                 # selects row h+1 (ky=2)
    b1 = jnp.tile(p["bn1_shift"], w).reshape(1, w * cout)
    bo = jnp.tile(p["bn2_shift"] + p["bns_shift"], w).reshape(1, w * cout)

    out2d = pl.pallas_call(
        _block_kernel,
        out_shape=jax.ShapeDtypeStruct((n * h, w * cout), f32),
        grid=(n,),
        in_specs=[
            pl.BlockSpec((None, h, w * cin), lambda i: (i, 0, 0)),
            pl.BlockSpec((3, w * cin, w * cout), lambda i: (0, 0, 0)),
            pl.BlockSpec((3, w * cout, w * cout), lambda i: (0, 0, 0)),
            pl.BlockSpec((w * cin, w * cout), lambda i: (0, 0)),
            pl.BlockSpec((h, h), lambda i: (0, 0)),
            pl.BlockSpec((h, h), lambda i: (0, 0)),
            pl.BlockSpec((1, w * cout), lambda i: (0, 0)),
            pl.BlockSpec((1, w * cout), lambda i: (0, 0)),
        ],
        out_specs=pl.BlockSpec((h, w * cout), lambda i: (i, 0)),
        compiler_params=pltpu.CompilerParams(
            dimension_semantics=("parallel",)),
    )(x3, a_stk, b_stk, ws_bd, s_up, s_dn, b1, bo)

    return jnp.transpose(out2d.reshape(n, h, w, cout), (0, 3, 1, 2))   # NCHW


# ----------------------------------------------------------------------------
# Pure-JAX reference (unfused, NHWC) for correctness validation
# ----------------------------------------------------------------------------
def ref_forward(x_nchw, p):
    x = jnp.transpose(x_nchw, (0, 2, 3, 1)).astype(jnp.float32)
    hp = jax.lax.Precision.HIGHEST

    def dw(x, wgt):
        N, H, W, C = x.shape
        xp = jnp.pad(x, ((0, 0), (1, 1), (1, 1), (0, 0)))
        acc = jnp.zeros_like(x)
        for ky in range(3):
            for kx in range(3):
                acc = acc + xp[:, ky:ky + H, kx:kx + W, :] * wgt[ky, kx, :]
        return acc

    def pw(x, wgt, s, b):
        return jnp.einsum("nhwc,cd->nhwd", x, wgt, precision=hp) * s + b

    y = dw(x, p["w_dw1"])
    y = pw(y, p["w_pw1"], p["bn1_scale"], p["bn1_shift"])
    y = jnp.maximum(y, 0.0)
    y = dw(y, p["w_dw2"])
    y = pw(y, p["w_pw2"], p["bn2_scale"], p["bn2_shift"])
    skip = pw(x, p["w_skip"], p["bns_scale"], p["bns_shift"])
    return jnp.transpose(y + skip, (0, 3, 1, 2))


def make_params(key, cin, cout):
    ks = jax.random.split(key, 8)
    eps = 1e-5

    def bn_fold(c, base):
        gamma = 1.0 + 0.10 * jnp.arange(c, dtype=jnp.float32) + base
        beta = 0.05 * jnp.arange(c, dtype=jnp.float32) - base
        mean = 0.01 * jnp.arange(c, dtype=jnp.float32)
        var = 1.0 + 0.02 * jnp.arange(c, dtype=jnp.float32)
        scale = gamma / jnp.sqrt(var + eps)
        shift = beta - mean * scale
        return scale, shift

    bn1_s, bn1_b = bn_fold(cout, 0.0)
    bn2_s, bn2_b = bn_fold(cout, 0.1)
    bns_s, bns_b = bn_fold(cout, 0.2)

    return {
        # depthwise 3x3 weights, stored as (3, 3, C)   [PyTorch: (C,1,3,3)]
        "w_dw1": 0.2 * jax.random.normal(ks[0], (3, 3, cin), jnp.float32),
        "w_dw2": 0.2 * jax.random.normal(ks[1], (3, 3, cout), jnp.float32),
        # pointwise / skip 1x1 weights, stored as (Cin, Cout) [PyTorch: (Cout,Cin,1,1)]
        "w_pw1": 0.3 * jax.random.normal(ks[2], (cin, cout), jnp.float32),
        "w_pw2": 0.3 * jax.random.normal(ks[3], (cout, cout), jnp.float32),
        "w_skip": 0.3 * jax.random.normal(ks[4], (cin, cout), jnp.float32),
        "bn1_scale": bn1_s, "bn1_shift": bn1_b,
        "bn2_scale": bn2_s, "bn2_shift": bn2_b,
        "bns_scale": bns_s, "bns_shift": bns_b,
    }


if __name__ == "__main__":
    key = jax.random.PRNGKey(0)
    k_x, k_p = jax.random.split(key)

    N, C_IN, H, W = 2, 4, 16, 16
    C_OUT = 8

    x = jax.random.normal(k_x, (N, C_IN, H, W), jnp.float32)   # NCHW like PyTorch
    params = make_params(k_p, C_IN, C_OUT)

    out = jax.block_until_ready(jax.jit(block_forward)(x, params))
    ref = jax.block_until_ready(jax.jit(ref_forward)(x, params))

    assert out.shape == (N, C_OUT, H, W), out.shape
    err = float(jnp.max(jnp.abs(out - ref)))
    ref_scale = max(1.0, float(jnp.max(jnp.abs(ref))))
    # 2% of peak magnitude: covers MXU default-precision (bf16-pass) rounding of
    # the folded weights while still catching any layout / indexing bug (O(1)).
    assert err <= 2e-2 * ref_scale, (
        f"mismatch vs reference: max abs err={err}, ref scale={ref_scale}")

    print("KERNEL_OK")
</pallas_src>

<mosaic_0001>
module attributes {stable_mosaic.version = 11 : i64} {
  func.func @_block_kernel(%arg0: i32, %arg1: memref<1x16x64xf32, #tpu.memory_space<vmem>>, %arg2: memref<3x64x128xf32, #tpu.memory_space<vmem>>, %arg3: memref<3x128x128xf32, #tpu.memory_space<vmem>>, %arg4: memref<64x128xf32, #tpu.memory_space<vmem>>, %arg5: memref<16x16xf32, #tpu.memory_space<vmem>>, %arg6: memref<16x16xf32, #tpu.memory_space<vmem>>, %arg7: memref<1x128xf32, #tpu.memory_space<vmem>>, %arg8: memref<1x128xf32, #tpu.memory_space<vmem>>, %arg9: memref<16x128xf32, #tpu.memory_space<vmem>>) attributes {dimension_semantics = [#tpu.dimension_semantics<parallel>], iteration_bounds = array<i64: 2>, scalar_prefetch = 0 : i64, scratch_operands = 0 : i64, tpu.core_type = #tpu.core_type<tc>, window_params = [{transform_indices = @transform_0, window_bounds = array<i64: 1, 16, 64>}, {pipeline_mode = #tpu.pipeline_mode<synchronous>, transform_indices = @transform_1, window_bounds = array<i64: 3, 64, 128>}, {pipeline_mode = #tpu.pipeline_mode<synchronous>, transform_indices = @transform_2, window_bounds = array<i64: 3, 128, 128>}, {pipeline_mode = #tpu.pipeline_mode<synchronous>, transform_indices = @transform_3, window_bounds = array<i64: 64, 128>}, {pipeline_mode = #tpu.pipeline_mode<synchronous>, transform_indices = @transform_4, window_bounds = array<i64: 16, 16>}, {pipeline_mode = #tpu.pipeline_mode<synchronous>, transform_indices = @transform_5, window_bounds = array<i64: 16, 16>}, {pipeline_mode = #tpu.pipeline_mode<synchronous>, transform_indices = @transform_6, window_bounds = array<i64: 1, 128>}, {pipeline_mode = #tpu.pipeline_mode<synchronous>, transform_indices = @transform_7, window_bounds = array<i64: 1, 128>}, {transform_indices = @transform_8, window_bounds = array<i64: 16, 128>}]} {
    %c0 = arith.constant 0 : index
    %c0_0 = arith.constant 0 : index
    %c0_1 = arith.constant 0 : index
    %0 = vector.load %arg1[%c0, %c0_0, %c0_1] : memref<1x16x64xf32, #tpu.memory_space<vmem>>, vector<1x16x64xf32>
    %1 = vector.shape_cast %0 : vector<1x16x64xf32> to vector<16x64xf32>
    %c0_2 = arith.constant 0 : index
    %c0_3 = arith.constant 0 : index
    %2 = vector.load %arg5[%c0_2, %c0_3] : memref<16x16xf32, #tpu.memory_space<vmem>>, vector<16x16xf32>
    %c0_4 = arith.constant 0 : index
    %c0_5 = arith.constant 0 : index
    %3 = vector.load %arg6[%c0_4, %c0_5] : memref<16x16xf32, #tpu.memory_space<vmem>>, vector<16x16xf32>
    %c0_6 = arith.constant 0 : index
    %c0_7 = arith.constant 0 : index
    %c0_8 = arith.constant 0 : index
    %4 = vector.load %arg2[%c0_6, %c0_7, %c0_8] : memref<3x64x128xf32, #tpu.memory_space<vmem>>, vector<1x64x128xf32>
    %5 = vector.shape_cast %4 : vector<1x64x128xf32> to vector<64x128xf32>
    %cst = arith.constant dense<0.000000e+00> : vector<16x128xf32>
    %6 = tpu.matmul %1, %5, %cst {dimension_numbers = #tpu.dot_dimension_numbers<[1], [0], [0], [1], [0, 0, 1, 1], [], []>} : vector<16x64xf32>, vector<64x128xf32>, vector<16x128xf32> -> vector<16x128xf32>
    %c1 = arith.constant 1 : index
    %c0_9 = arith.constant 0 : index
    %c0_10 = arith.constant 0 : index
    %7 = vector.load %arg2[%c1, %c0_9, %c0_10] : memref<3x64x128xf32, #tpu.memory_space<vmem>>, vector<1x64x128xf32>
    %8 = vector.shape_cast %7 : vector<1x64x128xf32> to vector<64x128xf32>
    %cst_11 = arith.constant dense<0.000000e+00> : vector<16x128xf32>
    %9 = tpu.matmul %1, %8, %cst_11 {dimension_numbers = #tpu.dot_dimension_numbers<[1], [0], [0], [1], [0, 0, 1, 1], [], []>} : vector<16x64xf32>, vector<64x128xf32>, vector<16x128xf32> -> vector<16x128xf32>
    %c2 = arith.constant 2 : index
    %c0_12 = arith.constant 0 : index
    %c0_13 = arith.constant 0 : index
    %10 = vector.load %arg2[%c2, %c0_12, %c0_13] : memref<3x64x128xf32, #tpu.memory_space<vmem>>, vector<1x64x128xf32>
    %11 = vector.shape_cast %10 : vector<1x64x128xf32> to vector<64x128xf32>
    %cst_14 = arith.constant dense<0.000000e+00> : vector<16x128xf32>
    %12 = tpu.matmul %1, %11, %cst_14 {dimension_numbers = #tpu.dot_dimension_numbers<[1], [0], [0], [1], [0, 0, 1, 1], [], []>} : vector<16x64xf32>, vector<64x128xf32>, vector<16x128xf32> -> vector<16x128xf32>
    %cst_15 = arith.constant dense<0.000000e+00> : vector<16x128xf32>
    %13 = tpu.matmul %2, %6, %cst_15 {dimension_numbers = #tpu.dot_dimension_numbers<[1], [0], [0], [1], [0, 0, 1, 1], [], []>} : vector<16x16xf32>, vector<16x128xf32>, vector<16x128xf32> -> vector<16x128xf32>
    %14 = arith.addf %13, %9 : vector<16x128xf32>
    %cst_16 = arith.constant dense<0.000000e+00> : vector<16x128xf32>
    %15 = tpu.matmul %3, %12, %cst_16 {dimension_numbers = #tpu.dot_dimension_numbers<[1], [0], [0], [1], [0, 0, 1, 1], [], []>} : vector<16x16xf32>, vector<16x128xf32>, vector<16x128xf32> -> vector<16x128xf32>
    %16 = arith.addf %14, %15 : vector<16x128xf32>
    %c0_17 = arith.constant 0 : index
    %c0_18 = arith.constant 0 : index
    %17 = vector.load %arg7[%c0_17, %c0_18] : memref<1x128xf32, #tpu.memory_space<vmem>>, vector<1x128xf32>
    %18 = vector.broadcast %17 : vector<1x128xf32> to vector<16x128xf32>
    %19 = arith.addf %16, %18 : vector<16x128xf32>
    %cst_19 = arith.constant 0.000000e+00 : f32
    %20 = vector.broadcast %cst_19 : f32 to vector<16x128xf32>
    %21 = arith.maximumf %19, %20 : vector<16x128xf32>
    %c0_20 = arith.constant 0 : index
    %c0_21 = arith.constant 0 : index
    %c0_22 = arith.constant 0 : index
    %22 = vector.load %arg3[%c0_20, %c0_21, %c0_22] : memref<3x128x128xf32, #tpu.memory_space<vmem>>, vector<1x128x128xf32>
    %23 = vector.shape_cast %22 : vector<1x128x128xf32> to vector<128x128xf32>
    %cst_23 = arith.constant dense<0.000000e+00> : vector<16x128xf32>
    %24 = tpu.matmul %21, %23, %cst_23 {dimension_numbers = #tpu.dot_dimension_numbers<[1], [0], [0], [1], [0, 0, 1, 1], [], []>} : vector<16x128xf32>, vector<128x128xf32>, vector<16x128xf32> -> vector<16x128xf32>
    %c1_24 = arith.constant 1 : index
    %c0_25 = arith.constant 0 : index
    %c0_26 = arith.constant 0 : index
    %25 = vector.load %arg3[%c1_24, %c0_25, %c0_26] : memref<3x128x128xf32, #tpu.memory_space<vmem>>, vector<1x128x128xf32>
    %26 = vector.shape_cast %25 : vector<1x128x128xf32> to vector<128x128xf32>
    %cst_27 = arith.constant dense<0.000000e+00> : vector<16x128xf32>
    %27 = tpu.matmul %21, %26, %cst_27 {dimension_numbers = #tpu.dot_dimension_numbers<[1], [0], [0], [1], [0, 0, 1, 1], [], []>} : vector<16x128xf32>, vector<128x128xf32>, vector<16x128xf32> -> vector<16x128xf32>
    %c2_28 = arith.constant 2 : index
    %c0_29 = arith.constant 0 : index
    %c0_30 = arith.constant 0 : index
    %28 = vector.load %arg3[%c2_28, %c0_29, %c0_30] : memref<3x128x128xf32, #tpu.memory_space<vmem>>, vector<1x128x128xf32>
    %29 = vector.shape_cast %28 : vector<1x128x128xf32> to vector<128x128xf32>
    %cst_31 = arith.constant dense<0.000000e+00> : vector<16x128xf32>
    %30 = tpu.matmul %21, %29, %cst_31 {dimension_numbers = #tpu.dot_dimension_numbers<[1], [0], [0], [1], [0, 0, 1, 1], [], []>} : vector<16x128xf32>, vector<128x128xf32>, vector<16x128xf32> -> vector<16x128xf32>
    %cst_32 = arith.constant dense<0.000000e+00> : vector<16x128xf32>
    %31 = tpu.matmul %2, %24, %cst_32 {dimension_numbers = #tpu.dot_dimension_numbers<[1], [0], [0], [1], [0, 0, 1, 1], [], []>} : vector<16x16xf32>, vector<16x128xf32>, vector<16x128xf32> -> vector<16x128xf32>
    %32 = arith.addf %31, %27 : vector<16x128xf32>
    %cst_33 = arith.constant dense<0.000000e+00> : vector<16x128xf32>
    %33 = tpu.matmul %3, %30, %cst_33 {dimension_numbers = #tpu.dot_dimension_numbers<[1], [0], [0], [1], [0, 0, 1, 1], [], []>} : vector<16x16xf32>, vector<16x128xf32>, vector<16x128xf32> -> vector<16x128xf32>
    %34 = arith.addf %32, %33 : vector<16x128xf32>
    %c0_34 = arith.constant 0 : index
    %c0_35 = arith.constant 0 : index
    %35 = vector.load %arg4[%c0_34, %c0_35] : memref<64x128xf32, #tpu.memory_space<vmem>>, vector<64x128xf32>
    %cst_36 = arith.constant dense<0.000000e+00> : vector<16x128xf32>
    %36 = tpu.matmul %1, %35, %cst_36 {dimension_numbers = #tpu.dot_dimension_numbers<[1], [0], [0], [1], [0, 0, 1, 1], [], []>} : vector<16x64xf32>, vector<64x128xf32>, vector<16x128xf32> -> vector<16x128xf32>
    %37 = arith.addf %34, %36 : vector<16x128xf32>
    %c0_37 = arith.constant 0 : index
    %c0_38 = arith.constant 0 : index
    %38 = vector.load %arg8[%c0_37, %c0_38] : memref<1x128xf32, #tpu.memory_space<vmem>>, vector<1x128xf32>
    %39 = vector.broadcast %38 : vector<1x128xf32> to vector<16x128xf32>
    %40 = arith.addf %37, %39 : vector<16x128xf32>
    %c0_39 = arith.constant 0 : index
    %c0_40 = arith.constant 0 : index
    %41 = vector.load %arg9[%c0_39, %c0_40] : memref<16x128xf32, #tpu.memory_space<vmem>>, vector<16x128xf32>
    tpu.vector_store %arg9[%c0_39, %c0_40], %40 {strides = array<i32>} : memref<16x128xf32, #tpu.memory_space<vmem>>, vector<16x128xf32>,
    return
  }
  func.func @transform_0(%arg0: i32) -> (i32, i32, i32) {
    %c0_i32 = arith.constant 0 : i32
    %c0_i32_0 = arith.constant 0 : i32
    %c0_i32_1 = arith.constant 0 : i32
    return %arg0, %c0_i32, %c0_i32_0 : i32, i32, i32
  }
  func.func @transform_1(%arg0: i32) -> (i32, i32, i32) {
    %c0_i32 = arith.constant 0 : i32
    %c0_i32_0 = arith.constant 0 : i32
    %c0_i32_1 = arith.constant 0 : i32
    %c0_i32_2 = arith.constant 0 : i32
    return %c0_i32, %c0_i32_0, %c0_i32_1 : i32, i32, i32
  }
  func.func @transform_2(%arg0: i32) -> (i32, i32, i32) {
    %c0_i32 = arith.constant 0 : i32
    %c0_i32_0 = arith.constant 0 : i32
    %c0_i32_1 = arith.constant 0 : i32
    %c0_i32_2 = arith.constant 0 : i32
    return %c0_i32, %c0_i32_0, %c0_i32_1 : i32, i32, i32
  }
  func.func @transform_3(%arg0: i32) -> (i32, i32) {
    %c0_i32 = arith.constant 0 : i32
    %c0_i32_0 = arith.constant 0 : i32
    %c0_i32_1 = arith.constant 0 : i32
    return %c0_i32, %c0_i32_0 : i32, i32
  }
  func.func @transform_4(%arg0: i32) -> (i32, i32) {
    %c0_i32 = arith.constant 0 : i32
    %c0_i32_0 = arith.constant 0 : i32
    %c0_i32_1 = arith.constant 0 : i32
    return %c0_i32, %c0_i32_0 : i32, i32
  }
  func.func @transform_5(%arg0: i32) -> (i32, i32) {
    %c0_i32 = arith.constant 0 : i32
    %c0_i32_0 = arith.constant 0 : i32
    %c0_i32_1 = arith.constant 0 : i32
    return %c0_i32, %c0_i32_0 : i32, i32
  }
  func.func @transform_6(%arg0: i32) -> (i32, i32) {
    %c0_i32 = arith.constant 0 : i32
    %c0_i32_0 = arith.constant 0 : i32
    %c0_i32_1 = arith.constant 0 : i32
    return %c0_i32, %c0_i32_0 : i32, i32
  }
  func.func @transform_7(%arg0: i32) -> (i32, i32) {
    %c0_i32 = arith.constant 0 : i32
    %c0_i32_0 = arith.constant 0 : i32
    %c0_i32_1 = arith.constant 0 : i32
    return %c0_i32, %c0_i32_0 : i32, i32
  }
  func.func @transform_8(%arg0: i32) -> (i32, i32) {
    %c0_i32 = arith.constant 0 : i32
    %c0_i32_0 = arith.constant 0 : i32
    return %arg0, %c0_i32 : i32, i32
  }
}

</mosaic_0001>

<llo_original>
// kernel: tile.18
$region0: #{tile.18}
  #allocation0 [shape = 's32[1]{0}', space=sflag, size = 0x4, scoped, tag = 'scoped memory for tile.18']
  %s0 = inlined_call_operand.vmem [shape: f32[8], index: 0, kind: input, shape index: {}]
  %s1 = inlined_call_operand.vmem [shape: f32[16,8], index: 1, kind: output, shape index: {}]
  // Predicated region
  $region2: #{tile.18} parent=0 // pred_check
    _
  $region3: #{tile.18} parent=0 // pred_check_branch
    %3 = sbr.rel (0) target = $region5
  $region4: #{tile.18} parent=0 // pred_region
    _
  $region5: #{tile.18} parent=0 // pred_fallthru
    _
  %v4 = vld [vmem:[%s0] ss:$0 sm:$0xff]
  %5 = vst [vmem:[%s1] sm:$0xff] %v4
  %s6 = scalar_lea.vmem %s1, 8
  %7 = vst [vmem:[%s6] sm:$0xff] %v4

// kernel: tile.19
$region0: #{tile.19}
  %s0 = inlined_call_operand.vmem [shape: f32[16,8], index: 0, kind: input, shape index: {}]
  %s1 = inlined_call_operand.vmem [shape: f32[1,128], index: 1, kind: output, shape index: {}]
  $region1: #{tile.19} parent=0
    #allocation0 [shape = 'u8[4096]{0}', space=vmem, size = 0x1000, scoped, tag = 'scoped mem for output reshape']
    %v2 = vld [vmem:[%s0] sm:$0x1]
    %vm3 = vcmask 64512
    %4 = vst.msk [vmem:[#allocation0] sm:$0x1] %vm3, %v2
    %s5 = scalar_lea.vmem %s0, 15
    %v6 = vld [vmem:[%s5] sm:$0x1]
    %7 = vrot.lane.b32.xlu0 %v6, 120
    %v8 = vpop.permute.xlu0 %7
    %vm9 = vcmask 1048512
    %10 = vst.msk [vmem:[#allocation0] sm:$0x1] %vm9, %v8
    %s11 = scalar_lea.vmem %s0, 14
    %v12 = vld [vmem:[%s11] sm:$0x1]
    %13 = vrot.lane.b32.xlu0 %v12, 112
    %v14 = vpop.permute.xlu0 %13
    %vm15 = vcmask 982912
    %16 = vst.msk [vmem:[#allocation0] sm:$0x1] %vm15, %v14
    %s17 = scalar_lea.vmem %s0, 13
    %v18 = vld [vmem:[%s17] sm:$0x1]
    %19 = vrot.lane.b32.xlu0 %v18, 104
    %v20 = vpop.permute.xlu0 %19
    %vm21 = vcmask 917312
    %22 = vst.msk [vmem:[#allocation0] sm:$0x1] %vm21, %v20
    %s23 = scalar_lea.vmem %s0, 12
    %v24 = vld [vmem:[%s23] sm:$0x1]
    %25 = vrot.lane.b32.xlu0 %v24, 96
    %v26 = vpop.permute.xlu0 %25
    %vm27 = vcmask 851712
    %28 = vst.msk [vmem:[#allocation0] sm:$0x1] %vm27, %v26
    %s29 = scalar_lea.vmem %s0, 11
    %v30 = vld [vmem:[%s29] sm:$0x1]
    %31 = vrot.lane.b32.xlu0 %v30, 88
    %v32 = vpop.permute.xlu0 %31
    %vm33 = vcmask 786112
    %34 = vst.msk [vmem:[#allocation0] sm:$0x1] %vm33, %v32
    %s35 = scalar_lea.vmem %s0, 10
    %v36 = vld [vmem:[%s35] sm:$0x1]
    %37 = vrot.lane.b32.xlu0 %v36, 80
    %v38 = vpop.permute.xlu0 %37
    %vm39 = vcmask 720512
    %40 = vst.msk [vmem:[#allocation0] sm:$0x1] %vm39, %v38
    %s41 = scalar_lea.vmem %s0, 9
    %v42 = vld [vmem:[%s41] sm:$0x1]
    %43 = vrot.lane.b32.xlu0 %v42, 72
    %v44 = vpop.permute.xlu0 %43
    %vm45 = vcmask 654912
    %46 = vst.msk [vmem:[#allocation0] sm:$0x1] %vm45, %v44
    %s47 = scalar_lea.vmem %s0, 8
    %v48 = vld [vmem:[%s47] sm:$0x1]
    %49 = vrot.lane.b32.xlu0 %v48, 64
    %v50 = vpop.permute.xlu0 %49
    %vm51 = vcmask 589312
    %52 = vst.msk [vmem:[#allocation0] sm:$0x1] %vm51, %v50
    %s53 = scalar_lea.vmem %s0, 7
    %v54 = vld [vmem:[%s53] sm:$0x1]
    %55 = vrot.lane.b32.xlu0 %v54, 56
    %v56 = vpop.permute.xlu0 %55
    %vm57 = vcmask 523712
    %58 = vst.msk [vmem:[#allocation0] sm:$0x1] %vm57, %v56
    %s59 = scalar_lea.vmem %s0, 6
    %v60 = vld [vmem:[%s59] sm:$0x1]
    %61 = vrot.lane.b32.xlu0 %v60, 48
    %v62 = vpop.permute.xlu0 %61
    %vm63 = vcmask 458112
    %64 = vst.msk [vmem:[#allocation0] sm:$0x1] %vm63, %v62
    %s65 = scalar_lea.vmem %s0, 5
    %v66 = vld [vmem:[%s65] sm:$0x1]
    %67 = vrot.lane.b32.xlu0 %v66, 40
    %v68 = vpop.permute.xlu0 %67
    %vm69 = vcmask 392512
    %70 = vst.msk [vmem:[#allocation0] sm:$0x1] %vm69, %v68
    %s71 = scalar_lea.vmem %s0, 4
    %v72 = vld [vmem:[%s71] sm:$0x1]
    %73 = vrot.lane.b32.xlu0 %v72, 32
    %v74 = vpop.permute.xlu0 %73
    %vm75 = vcmask 326912
    %76 = vst.msk [vmem:[#allocation0] sm:$0x1] %vm75, %v74
    %s77 = scalar_lea.vmem %s0, 3
    %v78 = vld [vmem:[%s77] sm:$0x1]
    %79 = vrot.lane.b32.xlu0 %v78, 24
    %v80 = vpop.permute.xlu0 %79
    %vm81 = vcmask 261312
    %82 = vst.msk [vmem:[#allocation0] sm:$0x1] %vm81, %v80
    %s83 = scalar_lea.vmem %s0, 2
    %v84 = vld [vmem:[%s83] sm:$0x1]
    %85 = vrot.lane.b32.xlu0 %v84, 16
    %v86 = vpop.permute.xlu0 %85
    %vm87 = vcmask 195712
    %88 = vst.msk [vmem:[#allocation0] sm:$0x1] %vm87, %v86
    %s89 = scalar_lea.vmem %s0, 1
    %v90 = vld [vmem:[%s89] sm:$0x1]
    %91 = vrot.lane.b32.xlu0 %v90, 8
    %v92 = vpop.permute.xlu0 %91
    %vm93 = vcmask 130112
    %94 = vst.msk [vmem:[#allocation0] sm:$0x1] %vm93, %v92
    %s96 = sshll.u32 1, 1
    %s97 = ssub.s32 %s96, 1
    %v99 = vld [vmem:[#allocation0] sm:%s97]
    %s100 = sshll.u32 1, 1
    %s101 = ssub.s32 %s100, 1
    %102 = vst [vmem:[%s1] sm:%s101] %v99

// kernel: block_forward.1
$region0: #{block_forward.1}
  #allocation0 [shape = 'u32[]', space=smem, size = 0x4, offset = 0x4, fixed_abs, tag = 'smem constant byte address 0x4 - core index']
  #allocation1 [shape = 'u32[144,128]{1,0:T(1,128)}', space=vmem, size = 0x12000, scoped, tag = 'internal scratch']
  %s0 = inlined_call_operand.vmem [shape: f32[2,16,64], index: 0, kind: input, shape index: {}]
  %s1 = inlined_call_operand.vmem [shape: f32[3,64,128], index: 1, kind: input, shape index: {}]
  %s2 = inlined_call_operand.vmem [shape: f32[3,128,128], index: 2, kind: input, shape index: {}]
  %s3 = inlined_call_operand.vmem [shape: f32[64,128], index: 3, kind: input, shape index: {}]
  %s4 = inlined_call_operand.vmem [shape: f32[16,16], index: 4, kind: input, shape index: {}]
  %s5 = inlined_call_operand.vmem [shape: f32[16,16], index: 5, kind: input, shape index: {}]
  %s6 = inlined_call_operand.vmem [shape: f32[1,128], index: 6, kind: input, shape index: {}]
  %s7 = inlined_call_operand.vmem [shape: f32[1,128], index: 7, kind: input, shape index: {}]
  %s8 = inlined_call_operand.vmem [shape: f32[32,128], index: 8, kind: output, shape index: {}]
  %s9 = sld [smem:[#allocation0]]
  $region65: #{block_forward.1} parent=0
    _
  %s11 = ssub.s32 1, %s9
  %s12 = scalar_select 0, %s11, %s9
  loop: start=0, step=1, limit=4
  $region2: #{block_forward.1} parent=0 // loop_pre_header
    _
  $region3: #{block_forward.1} parent=0 // loop_header
    %s14 = sphi 0, %s18
    %p15 = scmp.ge.s32.totalorder %s14, 4
    %s24 = sphi 0, %s26
    %s27 = sphi 0, %s24
    %s28 = sphi 0, %s27
    %s44 = sphi 0, %s28
    %s48 = sphi 0, %s48
    %s50 = sphi 0, %s48
    %s51 = sphi 0, %s50
    %s65 = sphi 0, %s51
    %s69 = sphi 0, %s69
    %s71 = sphi 0, %s69
    %s72 = sphi 0, %s71
    %s86 = sphi 0, %s72
    %s90 = sphi 0, %s90
    %s92 = sphi 0, %s90
    %s93 = sphi 0, %s92
    %s107 = sphi 0, %s93
    %s111 = sphi 0, %s111
    %s113 = sphi 0, %s111
    %s114 = sphi 0, %s113
    %s128 = sphi 0, %s114
    %s132 = sphi 0, %s132
    %s134 = sphi 0, %s132
    %s135 = sphi 0, %s134
    %s149 = sphi 0, %s135
    %s153 = sphi 0, %s153
    %s155 = sphi 0, %s153
    %s156 = sphi 0, %s155
    %s170 = sphi 0, %s156
    %s174 = sphi 0, %s174
    %s176 = sphi 0, %s174
    %s177 = sphi 0, %s176
    %s191 = sphi 0, %s177
    %s197 = sphi 0, %s199
    %s200 = sphi 0, %s197
    %s201 = sphi 0, %s200
    %s217 = sphi 0, %s201
  $region4: #{block_forward.1} parent=0 // loop_header_branch
    %17 = sbr.rel (%p15) target = $region8
  $region5: #{block_forward.1} parent=0 // loop_body
    %s19 = ssub.s32 %s14, 1
    %s20 = ssub.s32 %s14, 2
    %s21 = sadd.s32 %s14, 1
    %s22 = ssub.s32 %s14, %s21
    %p23 = scmp.eq.s32.totalorder %s22, 0
    %s25 = sadd.s32 %s24, 1
    %s26 = scalar_select %p23, %s24, %s25
    %p29 = pneg %p23
    %p30 = scmp.eq.s32.totalorder %s14, 1
    %p31 = por %p29, %p30
    %p32 = scmp.ne.s32.totalorder %s24, %s27
    %p33 = scmp.eq.s32.totalorder %s14, 0
    %p34 = por %p32, %p33
    %p35 = scmp.ne.s32.totalorder %s24, %s27
    %p36 = scmp.eq.s32.totalorder %s19, 1
    %p37 = por %p35, %p36
    %p38 = scmp.ne.s32.totalorder %s27, %s28
    %p39 = scmp.eq.s32.totalorder %s19, 0
    %p40 = por %p38, %p39
    %p41 = scmp.ne.s32.totalorder %s27, %s28
    %p42 = scmp.eq.s32.totalorder %s20, 1
    %p43 = por %p41, %p42
    %p45 = scmp.ne.s32.totalorder %s28, %s44
    %p46 = scmp.eq.s32.totalorder %s20, 0
    %p47 = por %p45, %p46
    %s49 = sadd.s32 %s48, 1
    %p52 = scmp.eq.s32.totalorder %s14, 1
    %p53 = scmp.ne.s32.totalorder %s48, %s50
    %p54 = scmp.eq.s32.totalorder %s14, 0
    %p55 = por %p53, %p54
    %p56 = scmp.ne.s32.totalorder %s48, %s50
    %p57 = scmp.eq.s32.totalorder %s19, 1
    %p58 = por %p56, %p57
    %p59 = scmp.ne.s32.totalorder %s50, %s51
    %p60 = scmp.eq.s32.totalorder %s19, 0
    %p61 = por %p59, %p60
    %p62 = scmp.ne.s32.totalorder %s50, %s51
    %p63 = scmp.eq.s32.totalorder %s20, 1
    %p64 = por %p62, %p63
    %p66 = scmp.ne.s32.totalorder %s51, %s65
    %p67 = scmp.eq.s32.totalorder %s20, 0
    %p68 = por %p66, %p67
    %s70 = sadd.s32 %s69, 1
    %p73 = scmp.eq.s32.totalorder %s14, 1
    %p74 = scmp.ne.s32.totalorder %s69, %s71
    %p75 = scmp.eq.s32.totalorder %s14, 0
    %p76 = por %p74, %p75
    %p77 = scmp.ne.s32.totalorder %s69, %s71
    %p78 = scmp.eq.s32.totalorder %s19, 1
    %p79 = por %p77, %p78
    %p80 = scmp.ne.s32.totalorder %s71, %s72
    %p81 = scmp.eq.s32.totalorder %s19, 0
    %p82 = por %p80, %p81
    %p83 = scmp.ne.s32.totalorder %s71, %s72
    %p84 = scmp.eq.s32.totalorder %s20, 1
    %p85 = por %p83, %p84
    %p87 = scmp.ne.s32.totalorder %s72, %s86
    %p88 = scmp.eq.s32.totalorder %s20, 0
    %p89 = por %p87, %p88
    %s91 = sadd.s32 %s90, 1
    %p94 = scmp.eq.s32.totalorder %s14, 1
    %p95 = scmp.ne.s32.totalorder %s90, %s92
    %p96 = scmp.eq.s32.totalorder %s14, 0
    %p97 = por %p95, %p96
    %p98 = scmp.ne.s32.totalorder %s90, %s92
    %p99 = scmp.eq.s32.totalorder %s19, 1
    %p100 = por %p98, %p99
    %p101 = scmp.ne.s32.totalorder %s92, %s93
    %p102 = scmp.eq.s32.totalorder %s19, 0
    %p103 = por %p101, %p102
    %p104 = scmp.ne.s32.totalorder %s92, %s93
    %p105 = scmp.eq.s32.totalorder %s20, 1
    %p106 = por %p104, %p105
    %p108 = scmp.ne.s32.totalorder %s93, %s107
    %p109 = scmp.eq.s32.totalorder %s20, 0
    %p110 = por %p108, %p109
    %s112 = sadd.s32 %s111, 1
    %p115 = scmp.eq.s32.totalorder %s14, 1
    %p116 = scmp.ne.s32.totalorder %s111, %s113
    %p117 = scmp.eq.s32.totalorder %s14, 0
    %p118 = por %p116, %p117
    %p119 = scmp.ne.s32.totalorder %s111, %s113
    %p120 = scmp.eq.s32.totalorder %s19, 1
    %p121 = por %p119, %p120
    %p122 = scmp.ne.s32.totalorder %s113, %s114
    %p123 = scmp.eq.s32.totalorder %s19, 0
    %p124 = por %p122, %p123
    %p125 = scmp.ne.s32.totalorder %s113, %s114
    %p126 = scmp.eq.s32.totalorder %s20, 1
    %p127 = por %p125, %p126
    %p129 = scmp.ne.s32.totalorder %s114, %s128
    %p130 = scmp.eq.s32.totalorder %s20, 0
    %p131 = por %p129, %p130
    %s133 = sadd.s32 %s132, 1
    %p136 = scmp.eq.s32.totalorder %s14, 1
    %p137 = scmp.ne.s32.totalorder %s132, %s134
    %p138 = scmp.eq.s32.totalorder %s14, 0
    %p139 = por %p137, %p138
    %p140 = scmp.ne.s32.totalorder %s132, %s134
    %p141 = scmp.eq.s32.totalorder %s19, 1
    %p142 = por %p140, %p141
    %p143 = scmp.ne.s32.totalorder %s134, %s135
    %p144 = scmp.eq.s32.totalorder %s19, 0
    %p145 = por %p143, %p144
    %p146 = scmp.ne.s32.totalorder %s134, %s135
    %p147 = scmp.eq.s32.totalorder %s20, 1
    %p148 = por %p146, %p147
    %p150 = scmp.ne.s32.totalorder %s135, %s149
    %p151 = scmp.eq.s32.totalorder %s20, 0
    %p152 = por %p150, %p151
    %s154 = sadd.s32 %s153, 1
    %p157 = scmp.eq.s32.totalorder %s14, 1
    %p158 = scmp.ne.s32.totalorder %s153, %s155
    %p159 = scmp.eq.s32.totalorder %s14, 0
    %p160 = por %p158, %p159
    %p161 = scmp.ne.s32.totalorder %s153, %s155
    %p162 = scmp.eq.s32.totalorder %s19, 1
    %p163 = por %p161, %p162
    %p164 = scmp.ne.s32.totalorder %s155, %s156
    %p165 = scmp.eq.s32.totalorder %s19, 0
    %p166 = por %p164, %p165
    %p167 = scmp.ne.s32.totalorder %s155, %s156
    %p168 = scmp.eq.s32.totalorder %s20, 1
    %p169 = por %p167, %p168
    %p171 = scmp.ne.s32.totalorder %s156, %s170
    %p172 = scmp.eq.s32.totalorder %s20, 0
    %p173 = por %p171, %p172
    %s175 = sadd.s32 %s174, 1
    %p178 = scmp.eq.s32.totalorder %s14, 1
    %p179 = scmp.ne.s32.totalorder %s174, %s176
    %p180 = scmp.eq.s32.totalorder %s14, 0
    %p181 = por %p179, %p180
    %p182 = scmp.ne.s32.totalorder %s174, %s176
    %p183 = scmp.eq.s32.totalorder %s19, 1
    %p184 = por %p182, %p183
    %p185 = scmp.ne.s32.totalorder %s176, %s177
    %p186 = scmp.eq.s32.totalorder %s19, 0
    %p187 = por %p185, %p186
    %p188 = scmp.ne.s32.totalorder %s176, %s177
    %p189 = scmp.eq.s32.totalorder %s20, 1
    %p190 = por %p188, %p189
    %p192 = scmp.ne.s32.totalorder %s177, %s191
    %p193 = scmp.eq.s32.totalorder %s20, 0
    %p194 = por %p192, %p193
    %s195 = ssub.s32 %s14, %s21
    %p196 = scmp.eq.s32.totalorder %s195, 0
    %s198 = sadd.s32 %s197, 1
    %s199 = scalar_select %p196, %s197, %s198
    %p202 = pneg %p196
    %p203 = scmp.eq.s32.totalorder %s14, 1
    %p204 = por %p202, %p203
    %p205 = scmp.ne.s32.totalorder %s197, %s200
    %p206 = scmp.eq.s32.totalorder %s14, 0
    %p207 = por %p205, %p206
    %p208 = scmp.ne.s32.totalorder %s197, %s200
    %p209 = scmp.eq.s32.totalorder %s19, 1
    %p210 = por %p208, %p209
    %p211 = scmp.ne.s32.totalorder %s200, %s201
    %p212 = scmp.eq.s32.totalorder %s19, 0
    %p213 = por %p211, %p212
    %p214 = scmp.ne.s32.totalorder %s200, %s201
    %p215 = scmp.eq.s32.totalorder %s20, 1
    %p216 = por %p214, %p215
    %p218 = scmp.ne.s32.totalorder %s201, %s217
    %p219 = scmp.eq.s32.totalorder %s20, 0
    %p220 = por %p218, %p219
    %p221 = scmp.le.s32.totalorder 1, %s14
    %p222 = scmp.lt.s32.totalorder %s14, 3
    %p223 = pnand %p221, %p222
    %p224 = pneg %p223
    // Predicated region
    $region9: #{block_forward.1} parent=5 // pred_check
      _
    $region10: #{block_forward.1} parent=5 // pred_check_branch
      %226 = sbr.rel (%p223) target = $region12
    $region11: #{block_forward.1} parent=5 // pred_region
      %s227 = ssub.s32 %s14, 1
      // Predicated region
      $region13: #{block_forward.1} parent=11 // pred_check
        %p228 = pneg %p61
      $region14: #{block_forward.1} parent=11 // pred_check_branch
        %230 = sbr.rel (%p228) target = $region16
      $region15: #{block_forward.1} parent=11 // pred_region
        _
      $region16: #{block_forward.1} parent=11 // pred_fallthru
        _
      // Predicated region
      $region17: #{block_forward.1} parent=11 // pred_check
        %p231 = pneg %p82
      $region18: #{block_forward.1} parent=11 // pred_check_branch
        %233 = sbr.rel (%p231) target = $region20
      $region19: #{block_forward.1} parent=11 // pred_region
        _
      $region20: #{block_forward.1} parent=11 // pred_fallthru
        _
      // Predicated region
      $region21: #{block_forward.1} parent=11 // pred_check
        %p234 = pneg %p103
      $region22: #{block_forward.1} parent=11 // pred_check_branch
        %236 = sbr.rel (%p234) target = $region24
      $region23: #{block_forward.1} parent=11 // pred_region
        _
      $region24: #{block_forward.1} parent=11 // pred_fallthru
        _
      // Predicated region
      $region25: #{block_forward.1} parent=11 // pred_check
        %p237 = pneg %p124
      $region26: #{block_forward.1} parent=11 // pred_check_branch
        %239 = sbr.rel (%p237) target = $region28
      $region27: #{block_forward.1} parent=11 // pred_region
        _
      $region28: #{block_forward.1} parent=11 // pred_fallthru
        _
      // Predicated region
      $region29: #{block_forward.1} parent=11 // pred_check
        %p240 = pneg %p145
      $region30: #{block_forward.1} parent=11 // pred_check_branch
        %242 = sbr.rel (%p240) target = $region32
      $region31: #{block_forward.1} parent=11 // pred_region
        _
      $region32: #{block_forward.1} parent=11 // pred_fallthru
        _
      // Predicated region
      $region33: #{block_forward.1} parent=11 // pred_check
        %p243 = pneg %p166
      $region34: #{block_forward.1} parent=11 // pred_check_branch
        %245 = sbr.rel (%p243) target = $region36
      $region35: #{block_forward.1} parent=11 // pred_region
        _
      $region36: #{block_forward.1} parent=11 // pred_fallthru
        _
      // Predicated region
      $region37: #{block_forward.1} parent=11 // pred_check
        %p246 = pneg %p187
      $region38: #{block_forward.1} parent=11 // pred_check_branch
        %248 = sbr.rel (%p246) target = $region40
      $region39: #{block_forward.1} parent=11 // pred_region
        _
      $region40: #{block_forward.1} parent=11 // pred_fallthru
        _
    $region12: #{block_forward.1} parent=5 // pred_fallthru
      _
    %p249 = scmp.lt.s32.totalorder %s14, 2
    // Predicated region
    $region41: #{block_forward.1} parent=5 // pred_check
      %p250 = pneg %p249
    $region42: #{block_forward.1} parent=5 // pred_check_branch
      %252 = sbr.rel (%p250) target = $region44
    $region43: #{block_forward.1} parent=5 // pred_region
      // Predicated region
      $region45: #{block_forward.1} parent=43 // pred_check
        %p253 = pneg %p34
      $region46: #{block_forward.1} parent=43 // pred_check_branch
        %255 = sbr.rel (%p253) target = $region48
      $region47: #{block_forward.1} parent=43 // pred_region
        %p256 = scmp.lt.s32.totalorder %s14, 1
        %s257 = scalar_select %p256, %s14, 1
        %s258 = smul.addr %s257, 2
        %s259 = smul.addr %s258, 8
        %s260 = scalar_lea.vmem %s0, %s259
      $region48: #{block_forward.1} parent=43 // pred_fallthru
        _
    $region44: #{block_forward.1} parent=5 // pred_fallthru
      _
    %p261 = scmp.le.s32.totalorder 1, %s14
    %p262 = scmp.lt.s32.totalorder %s14, 3
    %p263 = pnand %p261, %p262
    %p264 = pneg %p263
    // Predicated region
    $region49: #{block_forward.1} parent=5 // pred_check
      _
    $region50: #{block_forward.1} parent=5 // pred_check_branch
      %266 = sbr.rel (%p263) target = $region52
    $region51: #{block_forward.1} parent=5 // pred_region
      %s267 = ssub.s32 %s14, 1
      %p268 = scmp.lt.s32.totalorder %s19, 1
      %s269 = scalar_select %p268, %s19, 1
      %s270 = smul.addr %s269, 2
      %s271 = smul.addr %s270, 8
      %s272 = scalar_lea.vmem %s0, %s271
      %p273 = pneg %p40
      %p274 = pneg %p37
      %p275 = pneg %p61
      %p276 = pneg %p58
      %p277 = pneg %p82
      %p278 = pneg %p79
      %p279 = pneg %p103
      %p280 = pneg %p100
      %p281 = pneg %p124
      %p282 = pneg %p121
      %p283 = pneg %p145
      %p284 = pneg %p142
      %p285 = pneg %p166
      %p286 = pneg %p163
      %p287 = pneg %p187
      %p288 = pneg %p184
      %p289 = pneg %p213
      %p290 = pneg %p210
      %s291 = smul.u32 2, %s19
      %p292 = scmp.lt.s32.totalorder %s291, 3
      %s293 = scalar_select %p292, %s291, 3
      %s294 = smul.addr %s293, 8
      %s295 = scalar_lea.vmem %s8, %s294
      %p296 = scmp.lt.s32.totalorder %s19, 1
      %s297 = scalar_select %p296, %s19, 1
      %s298 = smul.addr %s297, 2
      %s299 = smul.addr %s298, 8
      %s300 = scalar_lea.vmem %s0, %s299
      %s301 = smul.u32 2, %s19
      %p302 = scmp.lt.s32.totalorder %s301, 3
      %s303 = scalar_select %p302, %s301, 3
      %s304 = smul.addr %s303, 8
      %s305 = scalar_lea.vmem %s8, %s304
      %s306 = smul.u32 2, %s19
      %v307 = vld [vmem:[%s300] sm:$0xff]
      %v308 = vld [vmem:[%s300 + $0x8] sm:$0xff]
      %v309 = vld [vmem:[%s4] sm:$0xff]
      %v310 = vld [vmem:[%s4 + $0x8] sm:$0xff]
      %v311 = vld [vmem:[%s5] sm:$0xff]
      %v312 = vld [vmem:[%s5 + $0x8] sm:$0xff]
      %v313 = vld [vmem:[%s1] sm:$0xff]
      %v314 = vld [vmem:[%s1 + $0x8] sm:$0xff]
      %v315 = vld [vmem:[%s1 + $0x10] sm:$0xff]
      %v316 = vld [vmem:[%s1 + $0x18] sm:$0xff]
      %v317 = vld [vmem:[%s1 + $0x20] sm:$0xff]
      %v318 = vld [vmem:[%s1 + $0x28] sm:$0xff]
      %v319 = vld [vmem:[%s1 + $0x30] sm:$0xff]
      %v320 = vld [vmem:[%s1 + $0x38] sm:$0xff]
      %vm321 = vcmask 523264
      %v323 = vsel %vm321, %v307, 0
      %v326 = vsel %vm321, %v308, 0
      %328 = vmatprep.subr.mxu0 0.0
      %329 = vmatpush1.msra.mxu0 0.0
      %330 = vmatprep.subr.mxu0 0.0
      %331 = vmatpush1.msra.mxu0 0.0
      %332 = vmatprep.subr.mxu0 0.0
      %333 = vmatpush1.msra.mxu0 0.0
      %334 = vmatprep.subr.mxu0 0.0
      %335 = vmatpush1.msra.mxu0 0.0
      %336 = vmatprep.subr.mxu0 0.0
      %337 = vmatpush1.msra.mxu0 0.0
      %338 = vmatprep.subr.mxu0 0.0
      %339 = vmatpush1.msra.mxu0 0.0
      %340 = vmatprep.subr.mxu0 0.0
      %341 = vmatpush1.msra.mxu0 0.0
      %342 = vmatprep.subr.mxu0 0.0
      %343 = vmatpush1.msra.mxu0 0.0
      %344 = vmatprep.subr.mxu0 0.0
      %345 = vmatpush1.msra.mxu0 %v320
      %346 = vmatprep.subr.mxu0 0.0
      %347 = vmatpush1.msra.mxu0 %v319
      %348 = vmatprep.subr.mxu0 0.0
      %349 = vmatpush1.msra.mxu0 %v318
      %350 = vmatprep.subr.mxu0 0.0
      %351 = vmatpush1.msra.mxu0 %v317
      %352 = vmatprep.subr.mxu0 0.0
      %353 = vmatpush1.msra.mxu0 %v316
      %354 = vmatprep.subr.mxu0 0.0
      %355 = vmatpush1.msra.mxu0 %v315
      %356 = vmatprep.subr.mxu0 0.0
      %357 = vmatpush1.msra.mxu0 %v314
      %358 = vmatprep.subr.mxu0 0.0
      %359 = vmatpush1.msra.mxu0 %v313
      %360 = vmatprep.subr.mxu0 0.0
      %361 = vmatpush2.msra.mxu0 0.0
      %362 = vmatprep.subr.mxu0 0.0
      %363 = vmatpush2.msra.mxu0 0.0
      %364 = vmatprep.subr.mxu0 0.0
      %365 = vmatpush2.msra.mxu0 0.0
      %366 = vmatprep.subr.mxu0 0.0
      %367 = vmatpush2.msra.mxu0 0.0
      %368 = vmatprep.subr.mxu0 0.0
      %369 = vmatpush2.msra.mxu0 0.0
      %370 = vmatprep.subr.mxu0 0.0
      %371 = vmatpush2.msra.mxu0 0.0
      %372 = vmatprep.subr.mxu0 0.0
      %373 = vmatpush2.msra.mxu0 0.0
      %374 = vmatprep.subr.mxu0 0.0
      %375 = vmatpush2.msra.mxu0 0.0
      %376 = vmatprep.subr.mxu0 0.0
      %377 = vmatpush2.msra.mxu0 0.0
      %378 = vmatprep.subr.mxu0 0.0
      %379 = vmatpush2.msra.mxu0 0.0
      %380 = vmatprep.subr.mxu0 0.0
      %381 = vmatpush2.msra.mxu0 0.0
      %382 = vmatprep.subr.mxu0 0.0
      %383 = vmatpush2.msra.mxu0 0.0
      %384 = vmatprep.subr.mxu0 0.0
      %385 = vmatpush2.msra.mxu0 0.0
      %386 = vmatprep.subr.mxu0 0.0
      %387 = vmatpush2.msra.mxu0 0.0
      %388 = vmatprep.subr.mxu0 0.0
      %389 = vmatpush2.msra.mxu0 0.0
      %390 = vmatprep.subr.mxu0 0.0
      %391 = vmatpush2.msra.mxu0 0.0
      %392 = vmatprep.mubr.f32.mxu0 0.0
      %393 = vmatmul.mubr.f32.gmra.mxu0 %v323
      %v394 = vpop.f32.mrf.mxu0
      %v395 = vadd.f32 0.0, %v394
      %v396 = vpop.f32.mrf.mxu0
      %397 = vmatprep.mubr.f32.mxu0 0.0
      %398 = vmatmul.mubr.f32.gmra.mxu0 %v326
      %v399 = vpop.f32.mrf.mxu0
      %v400 = vadd.f32 0.0, %v399
      %v401 = vpop.f32.mrf.mxu0
      %402 = vdwg.mxu0
      %s403 = scalar_lea.vmem %s1, 64
      %v404 = vld [vmem:[%s403] sm:$0xff]
      %v405 = vld [vmem:[%s403 + $0x8] sm:$0xff]
      %v406 = vld [vmem:[%s403 + $0x10] sm:$0xff]
      %v407 = vld [vmem:[%s403 + $0x18] sm:$0xff]
      %v408 = vld [vmem:[%s403 + $0x20] sm:$0xff]
      %v409 = vld [vmem:[%s403 + $0x28] sm:$0xff]
      %v410 = vld [vmem:[%s403 + $0x30] sm:$0xff]
      %v411 = vld [vmem:[%s403 + $0x38] sm:$0xff]
      %412 = vmatprep.subr.mxu0 0.0
      %413 = vmatpush1.msra.mxu0 0.0
      %414 = vmatprep.subr.mxu0 0.0
      %415 = vmatpush1.msra.mxu0 0.0
      %416 = vmatprep.subr.mxu0 0.0
      %417 = vmatpush1.msra.mxu0 0.0
      %418 = vmatprep.subr.mxu0 0.0
      %419 = vmatpush1.msra.mxu0 0.0
      %420 = vmatprep.subr.mxu0 0.0
      %421 = vmatpush1.msra.mxu0 0.0
      %422 = vmatprep.subr.mxu0 0.0
      %423 = vmatpush1.msra.mxu0 0.0
      %424 = vmatprep.subr.mxu0 0.0
      %425 = vmatpush1.msra.mxu0 0.0
      %426 = vmatprep.subr.mxu0 0.0
      %427 = vmatpush1.msra.mxu0 0.0
      %428 = vmatprep.subr.mxu0 0.0
      %429 = vmatpush1.msra.mxu0 %v411
      %430 = vmatprep.subr.mxu0 0.0
      %431 = vmatpush1.msra.mxu0 %v410
      %432 = vmatprep.subr.mxu0 0.0
      %433 = vmatpush1.msra.mxu0 %v409
      %434 = vmatprep.subr.mxu0 0.0
      %435 = vmatpush1.msra.mxu0 %v408
      %436 = vmatprep.subr.mxu0 0.0
      %437 = vmatpush1.msra.mxu0 %v407
      %438 = vmatprep.subr.mxu0 0.0
      %439 = vmatpush1.msra.mxu0 %v406
      %440 = vmatprep.subr.mxu0 0.0
      %441 = vmatpush1.msra.mxu0 %v405
      %442 = vmatprep.subr.mxu0 0.0
      %443 = vmatpush1.msra.mxu0 %v404
      %444 = vmatprep.subr.mxu0 0.0
      %445 = vmatpush2.msra.mxu0 0.0
      %446 = vmatprep.subr.mxu0 0.0
      %447 = vmatpush2.msra.mxu0 0.0
      %448 = vmatprep.subr.mxu0 0.0
      %449 = vmatpush2.msra.mxu0 0.0
      %450 = vmatprep.subr.mxu0 0.0
      %451 = vmatpush2.msra.mxu0 0.0
      %452 = vmatprep.subr.mxu0 0.0
      %453 = vmatpush2.msra.mxu0 0.0
      %454 = vmatprep.subr.mxu0 0.0
      %455 = vmatpush2.msra.mxu0 0.0
      %456 = vmatprep.subr.mxu0 0.0
      %457 = vmatpush2.msra.mxu0 0.0
      %458 = vmatprep.subr.mxu0 0.0
      %459 = vmatpush2.msra.mxu0 0.0
      %460 = vmatprep.subr.mxu0 0.0
      %461 = vmatpush2.msra.mxu0 0.0
      %462 = vmatprep.subr.mxu0 0.0
      %463 = vmatpush2.msra.mxu0 0.0
      %464 = vmatprep.subr.mxu0 0.0
      %465 = vmatpush2.msra.mxu0 0.0
      %466 = vmatprep.subr.mxu0 0.0
      %467 = vmatpush2.msra.mxu0 0.0
      %468 = vmatprep.subr.mxu0 0.0
      %469 = vmatpush2.msra.mxu0 0.0
      %470 = vmatprep.subr.mxu0 0.0
      %471 = vmatpush2.msra.mxu0 0.0
      %472 = vmatprep.subr.mxu0 0.0
      %473 = vmatpush2.msra.mxu0 0.0
      %474 = vmatprep.subr.mxu0 0.0
      %475 = vmatpush2.msra.mxu0 0.0
      %476 = vmatprep.mubr.f32.mxu0 0.0
      %477 = vmatmul.mubr.f32.gmra.mxu0 %v323
      %v478 = vpop.f32.mrf.mxu0
      %v479 = vadd.f32 0.0, %v478
      %v480 = vpop.f32.mrf.mxu0
      %481 = vmatprep.mubr.f32.mxu0 0.0
      %482 = vmatmul.mubr.f32.gmra.mxu0 %v326
      %v483 = vpop.f32.mrf.mxu0
      %v484 = vadd.f32 0.0, %v483
      %v485 = vpop.f32.mrf.mxu0
      %486 = vdwg.mxu0
      %s487 = scalar_lea.vmem %s1, 128
      %v488 = vld [vmem:[%s487] sm:$0xff]
      %v489 = vld [vmem:[%s487 + $0x8] sm:$0xff]
      %v490 = vld [vmem:[%s487 + $0x10] sm:$0xff]
      %v491 = vld [vmem:[%s487 + $0x18] sm:$0xff]
      %v492 = vld [vmem:[%s487 + $0x20] sm:$0xff]
      %v493 = vld [vmem:[%s487 + $0x28] sm:$0xff]
      %v494 = vld [vmem:[%s487 + $0x30] sm:$0xff]
      %v495 = vld [vmem:[%s487 + $0x38] sm:$0xff]
      %496 = vmatprep.subr.mxu0 0.0
      %497 = vmatpush1.msra.mxu0 0.0
      %498 = vmatprep.subr.mxu0 0.0
      %499 = vmatpush1.msra.mxu0 0.0
      %500 = vmatprep.subr.mxu0 0.0
      %501 = vmatpush1.msra.mxu0 0.0
      %502 = vmatprep.subr.mxu0 0.0
      %503 = vmatpush1.msra.mxu0 0.0
      %504 = vmatprep.subr.mxu0 0.0
      %505 = vmatpush1.msra.mxu0 0.0
      %506 = vmatprep.subr.mxu0 0.0
      %507 = vmatpush1.msra.mxu0 0.0
      %508 = vmatprep.subr.mxu0 0.0
      %509 = vmatpush1.msra.mxu0 0.0
      %510 = vmatprep.subr.mxu0 0.0
      %511 = vmatpush1.msra.mxu0 0.0
      %512 = vmatprep.subr.mxu0 0.0
      %513 = vmatpush1.msra.mxu0 %v495
      %514 = vmatprep.subr.mxu0 0.0
      %515 = vmatpush1.msra.mxu0 %v494
      %516 = vmatprep.subr.mxu0 0.0
      %517 = vmatpush1.msra.mxu0 %v493
      %518 = vmatprep.subr.mxu0 0.0
      %519 = vmatpush1.msra.mxu0 %v492
      %520 = vmatprep.subr.mxu0 0.0
      %521 = vmatpush1.msra.mxu0 %v491
      %522 = vmatprep.subr.mxu0 0.0
      %523 = vmatpush1.msra.mxu0 %v490
      %524 = vmatprep.subr.mxu0 0.0
      %525 = vmatpush1.msra.mxu0 %v489
      %526 = vmatprep.subr.mxu0 0.0
      %527 = vmatpush1.msra.mxu0 %v488
      %528 = vmatprep.subr.mxu0 0.0
      %529 = vmatpush2.msra.mxu0 0.0
      %530 = vmatprep.subr.mxu0 0.0
      %531 = vmatpush2.msra.mxu0 0.0
      %532 = vmatprep.subr.mxu0 0.0
      %533 = vmatpush2.msra.mxu0 0.0
      %534 = vmatprep.subr.mxu0 0.0
      %535 = vmatpush2.msra.mxu0 0.0
      %536 = vmatprep.subr.mxu0 0.0
      %537 = vmatpush2.msra.mxu0 0.0
      %538 = vmatprep.subr.mxu0 0.0
      %539 = vmatpush2.msra.mxu0 0.0
      %540 = vmatprep.subr.mxu0 0.0
      %541 = vmatpush2.msra.mxu0 0.0
      %542 = vmatprep.subr.mxu0 0.0
      %543 = vmatpush2.msra.mxu0 0.0
      %544 = vmatprep.subr.mxu0 0.0
      %545 = vmatpush2.msra.mxu0 0.0
      %546 = vmatprep.subr.mxu0 0.0
      %547 = vmatpush2.msra.mxu0 0.0
      %548 = vmatprep.subr.mxu0 0.0
      %549 = vmatpush2.msra.mxu0 0.0
      %550 = vmatprep.subr.mxu0 0.0
      %551 = vmatpush2.msra.mxu0 0.0
      %552 = vmatprep.subr.mxu0 0.0
      %553 = vmatpush2.msra.mxu0 0.0
      %554 = vmatprep.subr.mxu0 0.0
      %555 = vmatpush2.msra.mxu0 0.0
      %556 = vmatprep.subr.mxu0 0.0
      %557 = vmatpush2.msra.mxu0 0.0
      %558 = vmatprep.subr.mxu0 0.0
      %559 = vmatpush2.msra.mxu0 0.0
      %560 = vmatprep.mubr.f32.mxu0 0.0
      %561 = vmatmul.mubr.f32.gmra.mxu0 %v323
      %v562 = vpop.f32.mrf.mxu0
      %v563 = vadd.f32 0.0, %v562
      %v564 = vpop.f32.mrf.mxu0
      %565 = vmatprep.mubr.f32.mxu0 0.0
      %566 = vmatmul.mubr.f32.gmra.mxu0 %v326
      %v567 = vpop.f32.mrf.mxu0
      %v568 = vadd.f32 0.0, %v567
      %v569 = vpop.f32.mrf.mxu0
      %570 = vdwg.mxu0
      %vm571 = vcmask 130048
      %v573 = vsel %vm571, %v309, 0
      %v576 = vsel %vm571, %v310, 0
      %578 = vmatprep.subr.mxu0 0.0
      %579 = vmatpush1.msra.mxu0 0.0
      %580 = vmatprep.subr.mxu0 0.0
      %581 = vmatpush1.msra.mxu0 0.0
      %582 = vmatprep.subr.mxu0 0.0
      %583 = vmatpush1.msra.mxu0 0.0
      %584 = vmatprep.subr.mxu0 0.0
      %585 = vmatpush1.msra.mxu0 0.0
      %586 = vmatprep.subr.mxu0 0.0
      %587 = vmatpush1.msra.mxu0 0.0
      %588 = vmatprep.subr.mxu0 0.0
      %589 = vmatpush1.msra.mxu0 0.0
      %590 = vmatprep.subr.mxu0 0.0
      %591 = vmatpush1.msra.mxu0 0.0
      %592 = vmatprep.subr.mxu0 0.0
      %593 = vmatpush1.msra.mxu0 0.0
      %594 = vmatprep.subr.mxu0 0.0
      %595 = vmatpush1.msra.mxu0 0.0
      %596 = vmatprep.subr.mxu0 0.0
      %597 = vmatpush1.msra.mxu0 0.0
      %598 = vmatprep.subr.mxu0 0.0
      %599 = vmatpush1.msra.mxu0 0.0
      %600 = vmatprep.subr.mxu0 0.0
      %601 = vmatpush1.msra.mxu0 0.0
      %602 = vmatprep.subr.mxu0 0.0
      %603 = vmatpush1.msra.mxu0 0.0
      %604 = vmatprep.subr.mxu0 0.0
      %605 = vmatpush1.msra.mxu0 0.0
      %606 = vmatprep.subr.mxu0 0.0
      %607 = vmatpush1.msra.mxu0 %v400
      %608 = vmatprep.subr.mxu0 0.0
      %609 = vmatpush1.msra.mxu0 %v395
      %610 = vmatprep.subr.mxu0 0.0
      %611 = vmatpush2.msra.mxu0 0.0
      %612 = vmatprep.subr.mxu0 0.0
      %613 = vmatpush2.msra.mxu0 0.0
      %614 = vmatprep.subr.mxu0 0.0
      %615 = vmatpush2.msra.mxu0 0.0
      %616 = vmatprep.subr.mxu0 0.0
      %617 = vmatpush2.msra.mxu0 0.0
      %618 = vmatprep.subr.mxu0 0.0
      %619 = vmatpush2.msra.mxu0 0.0
      %620 = vmatprep.subr.mxu0 0.0
      %621 = vmatpush2.msra.mxu0 0.0
      %622 = vmatprep.subr.mxu0 0.0
      %623 = vmatpush2.msra.mxu0 0.0
      %624 = vmatprep.subr.mxu0 0.0
      %625 = vmatpush2.msra.mxu0 0.0
      %626 = vmatprep.subr.mxu0 0.0
      %627 = vmatpush2.msra.mxu0 0.0
      %628 = vmatprep.subr.mxu0 0.0
      %629 = vmatpush2.msra.mxu0 0.0
      %630 = vmatprep.subr.mxu0 0.0
      %631 = vmatpush2.msra.mxu0 0.0
      %632 = vmatprep.subr.mxu0 0.0
      %633 = vmatpush2.msra.mxu0 0.0
      %634 = vmatprep.subr.mxu0 0.0
      %635 = vmatpush2.msra.mxu0 0.0
      %636 = vmatprep.subr.mxu0 0.0
      %637 = vmatpush2.msra.mxu0 0.0
      %638 = vmatprep.subr.mxu0 0.0
      %639 = vmatpush2.msra.mxu0 0.0
      %640 = vmatprep.subr.mxu0 0.0
      %641 = vmatpush2.msra.mxu0 0.0
      %642 = vmatprep.mubr.f32.mxu0 0.0
      %643 = vmatmul.mubr.f32.gmra.mxu0 %v573
      %v644 = vpop.f32.mrf.mxu0
      %v645 = vadd.f32 %v479, %v644
      %v646 = vpop.f32.mrf.mxu0
      %647 = vmatprep.mubr.f32.mxu0 0.0
      %648 = vmatmul.mubr.f32.gmra.mxu0 %v576
      %v649 = vpop.f32.mrf.mxu0
      %v650 = vadd.f32 %v484, %v649
      %v651 = vpop.f32.mrf.mxu0
      %652 = vdwg.mxu0
      %v654 = vsel %vm571, %v311, 0
      %v657 = vsel %vm571, %v312, 0
      %659 = vmatprep.subr.mxu0 0.0
      %660 = vmatpush1.msra.mxu0 0.0
      %661 = vmatprep.subr.mxu0 0.0
      %662 = vmatpush1.msra.mxu0 0.0
      %663 = vmatprep.subr.mxu0 0.0
      %664 = vmatpush1.msra.mxu0 0.0
      %665 = vmatprep.subr.mxu0 0.0
      %666 = vmatpush1.msra.mxu0 0.0
      %667 = vmatprep.subr.mxu0 0.0
      %668 = vmatpush1.msra.mxu0 0.0
      %669 = vmatprep.subr.mxu0 0.0
      %670 = vmatpush1.msra.mxu0 0.0
      %671 = vmatprep.subr.mxu0 0.0
      %672 = vmatpush1.msra.mxu0 0.0
      %673 = vmatprep.subr.mxu0 0.0
      %674 = vmatpush1.msra.mxu0 0.0
      %675 = vmatprep.subr.mxu0 0.0
      %676 = vmatpush1.msra.mxu0 0.0
      %677 = vmatprep.subr.mxu0 0.0
      %678 = vmatpush1.msra.mxu0 0.0
      %679 = vmatprep.subr.mxu0 0.0
      %680 = vmatpush1.msra.mxu0 0.0
      %681 = vmatprep.subr.mxu0 0.0
      %682 = vmatpush1.msra.mxu0 0.0
      %683 = vmatprep.subr.mxu0 0.0
      %684 = vmatpush1.msra.mxu0 0.0
      %685 = vmatprep.subr.mxu0 0.0
      %686 = vmatpush1.msra.mxu0 0.0
      %687 = vmatprep.subr.mxu0 0.0
      %688 = vmatpush1.msra.mxu0 %v568
      %689 = vmatprep.subr.mxu0 0.0
      %690 = vmatpush1.msra.mxu0 %v563
      %691 = vmatprep.subr.mxu0 0.0
      %692 = vmatpush2.msra.mxu0 0.0
      %693 = vmatprep.subr.mxu0 0.0
      %694 = vmatpush2.msra.mxu0 0.0
      %695 = vmatprep.subr.mxu0 0.0
      %696 = vmatpush2.msra.mxu0 0.0
      %697 = vmatprep.subr.mxu0 0.0
      %698 = vmatpush2.msra.mxu0 0.0
      %699 = vmatprep.subr.mxu0 0.0
      %700 = vmatpush2.msra.mxu0 0.0
      %701 = vmatprep.subr.mxu0 0.0
      %702 = vmatpush2.msra.mxu0 0.0
      %703 = vmatprep.subr.mxu0 0.0
      %704 = vmatpush2.msra.mxu0 0.0
      %705 = vmatprep.subr.mxu0 0.0
      %706 = vmatpush2.msra.mxu0 0.0
      %707 = vmatprep.subr.mxu0 0.0
      %708 = vmatpush2.msra.mxu0 0.0
      %709 = vmatprep.subr.mxu0 0.0
      %710 = vmatpush2.msra.mxu0 0.0
      %711 = vmatprep.subr.mxu0 0.0
      %712 = vmatpush2.msra.mxu0 0.0
      %713 = vmatprep.subr.mxu0 0.0
      %714 = vmatpush2.msra.mxu0 0.0
      %715 = vmatprep.subr.mxu0 0.0
      %716 = vmatpush2.msra.mxu0 0.0
      %717 = vmatprep.subr.mxu0 0.0
      %718 = vmatpush2.msra.mxu0 0.0
      %719 = vmatprep.subr.mxu0 0.0
      %720 = vmatpush2.msra.mxu0 0.0
      %721 = vmatprep.subr.mxu0 0.0
      %722 = vmatpush2.msra.mxu0 0.0
      %723 = vmatprep.mubr.f32.mxu0 0.0
      %724 = vmatmul.mubr.f32.gmra.mxu0 %v654
      %v725 = vpop.f32.mrf.mxu0
      %v726 = vadd.f32 0.0, %v725
      %v727 = vpop.f32.mrf.mxu0
      %728 = vmatprep.mubr.f32.mxu0 0.0
      %729 = vmatmul.mubr.f32.gmra.mxu0 %v657
      %v730 = vpop.f32.mrf.mxu0
      %v731 = vadd.f32 0.0, %v730
      %v732 = vpop.f32.mrf.mxu0
      %733 = vdwg.mxu0
      %v734 = vadd.f32 %v645, %v726
      %v735 = vadd.f32 %v650, %v731
      %v736 = vld [vmem:[%s6] sm:$0x1]
      %v738 = vlaneseq
      %v739 = vshrl.u32 %v738, 7
      %v740 = vsub.s32 0, %v739
      %v741 = vrot.slane %v736, %v740
      %v743 = vadd.f32 %v734, %v741
      %v744 = vadd.f32 %v735, %v741
      %v745 = vmax.f32 %v743, 0.0
      %v746 = vmax.f32 %v744, 0.0
      %v747 = vld [vmem:[%s2] sm:$0xff]
      %v748 = vld [vmem:[%s2 + $0x8] sm:$0xff]
      %v749 = vld [vmem:[%s2 + $0x10] sm:$0xff]
      %v750 = vld [vmem:[%s2 + $0x18] sm:$0xff]
      %v751 = vld [vmem:[%s2 + $0x20] sm:$0xff]
      %v752 = vld [vmem:[%s2 + $0x28] sm:$0xff]
      %v753 = vld [vmem:[%s2 + $0x30] sm:$0xff]
      %v754 = vld [vmem:[%s2 + $0x38] sm:$0xff]
      %v755 = vld [vmem:[%s2 + $0x40] sm:$0xff]
      %v756 = vld [vmem:[%s2 + $0x48] sm:$0xff]
      %v757 = vld [vmem:[%s2 + $0x50] sm:$0xff]
      %v758 = vld [vmem:[%s2 + $0x58] sm:$0xff]
      %v759 = vld [vmem:[%s2 + $0x60] sm:$0xff]
      %v760 = vld [vmem:[%s2 + $0x68] sm:$0xff]
      %v761 = vld [vmem:[%s2 + $0x70] sm:$0xff]
      %v762 = vld [vmem:[%s2 + $0x78] sm:$0xff]
      %763 = vmatprep.subr.mxu0 0.0
      %764 = vmatpush1.msra.mxu0 %v762
      %765 = vmatprep.subr.mxu0 0.0
      %766 = vmatpush1.msra.mxu0 %v761
      %767 = vmatprep.subr.mxu0 0.0
      %768 = vmatpush1.msra.mxu0 %v760
      %769 = vmatprep.subr.mxu0 0.0
      %770 = vmatpush1.msra.mxu0 %v759
      %771 = vmatprep.subr.mxu0 0.0
      %772 = vmatpush1.msra.mxu0 %v758
      %773 = vmatprep.subr.mxu0 0.0
      %774 = vmatpush1.msra.mxu0 %v757
      %775 = vmatprep.subr.mxu0 0.0
      %776 = vmatpush1.msra.mxu0 %v756
      %777 = vmatprep.subr.mxu0 0.0
      %778 = vmatpush1.msra.mxu0 %v755
      %779 = vmatprep.subr.mxu0 0.0
      %780 = vmatpush1.msra.mxu0 %v754
      %781 = vmatprep.subr.mxu0 0.0
      %782 = vmatpush1.msra.mxu0 %v753
      %783 = vmatprep.subr.mxu0 0.0
      %784 = vmatpush1.msra.mxu0 %v752
      %785 = vmatprep.subr.mxu0 0.0
      %786 = vmatpush1.msra.mxu0 %v751
      %787 = vmatprep.subr.mxu0 0.0
      %788 = vmatpush1.msra.mxu0 %v750
      %789 = vmatprep.subr.mxu0 0.0
      %790 = vmatpush1.msra.mxu0 %v749
      %791 = vmatprep.subr.mxu0 0.0
      %792 = vmatpush1.msra.mxu0 %v748
      %793 = vmatprep.subr.mxu0 0.0
      %794 = vmatpush1.msra.mxu0 %v747
      %795 = vmatprep.subr.mxu0 0.0
      %796 = vmatpush2.msra.mxu0 0.0
      %797 = vmatprep.subr.mxu0 0.0
      %798 = vmatpush2.msra.mxu0 0.0
      %799 = vmatprep.subr.mxu0 0.0
      %800 = vmatpush2.msra.mxu0 0.0
      %801 = vmatprep.subr.mxu0 0.0
      %802 = vmatpush2.msra.mxu0 0.0
      %803 = vmatprep.subr.mxu0 0.0
      %804 = vmatpush2.msra.mxu0 0.0
      %805 = vmatprep.subr.mxu0 0.0
      %806 = vmatpush2.msra.mxu0 0.0
      %807 = vmatprep.subr.mxu0 0.0
      %808 = vmatpush2.msra.mxu0 0.0
      %809 = vmatprep.subr.mxu0 0.0
      %810 = vmatpush2.msra.mxu0 0.0
      %811 = vmatprep.subr.mxu0 0.0
      %812 = vmatpush2.msra.mxu0 0.0
      %813 = vmatprep.subr.mxu0 0.0
      %814 = vmatpush2.msra.mxu0 0.0
      %815 = vmatprep.subr.mxu0 0.0
      %816 = vmatpush2.msra.mxu0 0.0
      %817 = vmatprep.subr.mxu0 0.0
      %818 = vmatpush2.msra.mxu0 0.0
      %819 = vmatprep.subr.mxu0 0.0
      %820 = vmatpush2.msra.mxu0 0.0
      %821 = vmatprep.subr.mxu0 0.0
      %822 = vmatpush2.msra.mxu0 0.0
      %823 = vmatprep.subr.mxu0 0.0
      %824 = vmatpush2.msra.mxu0 0.0
      %825 = vmatprep.subr.mxu0 0.0
      %826 = vmatpush2.msra.mxu0 0.0
      %827 = vmatprep.mubr.f32.mxu0 0.0
      %828 = vmatmul.mubr.f32.gmra.mxu0 %v745
      %v829 = vpop.f32.mrf.mxu0
      %v830 = vadd.f32 0.0, %v829
      %v831 = vpop.f32.mrf.mxu0
      %832 = vmatprep.mubr.f32.mxu0 0.0
      %833 = vmatmul.mubr.f32.gmra.mxu0 %v746
      %v834 = vpop.f32.mrf.mxu0
      %v835 = vadd.f32 0.0, %v834
      %v836 = vpop.f32.mrf.mxu0
      %837 = vdwg.mxu0
      %s838 = scalar_lea.vmem %s2, 128
      %v839 = vld [vmem:[%s838] sm:$0xff]
      %v840 = vld [vmem:[%s838 + $0x8] sm:$0xff]
      %v841 = vld [vmem:[%s838 + $0x10] sm:$0xff]
      %v842 = vld [vmem:[%s838 + $0x18] sm:$0xff]
      %v843 = vld [vmem:[%s838 + $0x20] sm:$0xff]
      %v844 = vld [vmem:[%s838 + $0x28] sm:$0xff]
      %v845 = vld [vmem:[%s838 + $0x30] sm:$0xff]
      %v846 = vld [vmem:[%s838 + $0x38] sm:$0xff]
      %v847 = vld [vmem:[%s838 + $0x40] sm:$0xff]
      %v848 = vld [vmem:[%s838 + $0x48] sm:$0xff]
      %v849 = vld [vmem:[%s838 + $0x50] sm:$0xff]
      %v850 = vld [vmem:[%s838 + $0x58] sm:$0xff]
      %v851 = vld [vmem:[%s838 + $0x60] sm:$0xff]
      %v852 = vld [vmem:[%s838 + $0x68] sm:$0xff]
      %v853 = vld [vmem:[%s838 + $0x70] sm:$0xff]
      %v854 = vld [vmem:[%s838 + $0x78] sm:$0xff]
      %855 = vmatprep.subr.mxu0 0.0
      %856 = vmatpush1.msra.mxu0 %v854
      %857 = vmatprep.subr.mxu0 0.0
      %858 = vmatpush1.msra.mxu0 %v853
      %859 = vmatprep.subr.mxu0 0.0
      %860 = vmatpush1.msra.mxu0 %v852
      %861 = vmatprep.subr.mxu0 0.0
      %862 = vmatpush1.msra.mxu0 %v851
      %863 = vmatprep.subr.mxu0 0.0
      %864 = vmatpush1.msra.mxu0 %v850
      %865 = vmatprep.subr.mxu0 0.0
      %866 = vmatpush1.msra.mxu0 %v849
      %867 = vmatprep.subr.mxu0 0.0
      %868 = vmatpush1.msra.mxu0 %v848
      %869 = vmatprep.subr.mxu0 0.0
      %870 = vmatpush1.msra.mxu0 %v847
      %871 = vmatprep.subr.mxu0 0.0
      %872 = vmatpush1.msra.mxu0 %v846
      %873 = vmatprep.subr.mxu0 0.0
      %874 = vmatpush1.msra.mxu0 %v845
      %875 = vmatprep.subr.mxu0 0.0
      %876 = vmatpush1.msra.mxu0 %v844
      %877 = vmatprep.subr.mxu0 0.0
      %878 = vmatpush1.msra.mxu0 %v843
      %879 = vmatprep.subr.mxu0 0.0
      %880 = vmatpush1.msra.mxu0 %v842
      %881 = vmatprep.subr.mxu0 0.0
      %882 = vmatpush1.msra.mxu0 %v841
      %883 = vmatprep.subr.mxu0 0.0
      %884 = vmatpush1.msra.mxu0 %v840
      %885 = vmatprep.subr.mxu0 0.0
      %886 = vmatpush1.msra.mxu0 %v839
      %887 = vmatprep.subr.mxu0 0.0
      %888 = vmatpush2.msra.mxu0 0.0
      %889 = vmatprep.subr.mxu0 0.0
      %890 = vmatpush2.msra.mxu0 0.0
      %891 = vmatprep.subr.mxu0 0.0
      %892 = vmatpush2.msra.mxu0 0.0
      %893 = vmatprep.subr.mxu0 0.0
      %894 = vmatpush2.msra.mxu0 0.0
      %895 = vmatprep.subr.mxu0 0.0
      %896 = vmatpush2.msra.mxu0 0.0
      %897 = vmatprep.subr.mxu0 0.0
      %898 = vmatpush2.msra.mxu0 0.0
      %899 = vmatprep.subr.mxu0 0.0
      %900 = vmatpush2.msra.mxu0 0.0
      %901 = vmatprep.subr.mxu0 0.0
      %902 = vmatpush2.msra.mxu0 0.0
      %903 = vmatprep.subr.mxu0 0.0
      %904 = vmatpush2.msra.mxu0 0.0
      %905 = vmatprep.subr.mxu0 0.0
      %906 = vmatpush2.msra.mxu0 0.0
      %907 = vmatprep.subr.mxu0 0.0
      %908 = vmatpush2.msra.mxu0 0.0
      %909 = vmatprep.subr.mxu0 0.0
      %910 = vmatpush2.msra.mxu0 0.0
      %911 = vmatprep.subr.mxu0 0.0
      %912 = vmatpush2.msra.mxu0 0.0
      %913 = vmatprep.subr.mxu0 0.0
      %914 = vmatpush2.msra.mxu0 0.0
      %915 = vmatprep.subr.mxu0 0.0
      %916 = vmatpush2.msra.mxu0 0.0
      %917 = vmatprep.subr.mxu0 0.0
      %918 = vmatpush2.msra.mxu0 0.0
      %919 = vmatprep.mubr.f32.mxu0 0.0
      %920 = vmatmul.mubr.f32.gmra.mxu0 %v745
      %v921 = vpop.f32.mrf.mxu0
      %v922 = vadd.f32 0.0, %v921
      %v923 = vpop.f32.mrf.mxu0
      %924 = vmatprep.mubr.f32.mxu0 0.0
      %925 = vmatmul.mubr.f32.gmra.mxu0 %v746
      %v926 = vpop.f32.mrf.mxu0
      %v927 = vadd.f32 0.0, %v926
      %v928 = vpop.f32.mrf.mxu0
      %929 = vdwg.mxu0
      %s930 = scalar_lea.vmem %s2, 256
      %v931 = vld [vmem:[%s930] sm:$0xff]
      %v932 = vld [vmem:[%s930 + $0x8] sm:$0xff]
      %v933 = vld [vmem:[%s930 + $0x10] sm:$0xff]
      %v934 = vld [vmem:[%s930 + $0x18] sm:$0xff]
      %v935 = vld [vmem:[%s930 + $0x20] sm:$0xff]
      %v936 = vld [vmem:[%s930 + $0x28] sm:$0xff]
      %v937 = vld [vmem:[%s930 + $0x30] sm:$0xff]
      %v938 = vld [vmem:[%s930 + $0x38] sm:$0xff]
      %v939 = vld [vmem:[%s930 + $0x40] sm:$0xff]
      %v940 = vld [vmem:[%s930 + $0x48] sm:$0xff]
      %v941 = vld [vmem:[%s930 + $0x50] sm:$0xff]
      %v942 = vld [vmem:[%s930 + $0x58] sm:$0xff]
      %v943 = vld [vmem:[%s930 + $0x60] sm:$0xff]
      %v944 = vld [vmem:[%s930 + $0x68] sm:$0xff]
      %v945 = vld [vmem:[%s930 + $0x70] sm:$0xff]
      %v946 = vld [vmem:[%s930 + $0x78] sm:$0xff]
      %947 = vmatprep.subr.mxu0 0.0
      %948 = vmatpush1.msra.mxu0 %v946
      %949 = vmatprep.subr.mxu0 0.0
      %950 = vmatpush1.msra.mxu0 %v945
      %951 = vmatprep.subr.mxu0 0.0
      %952 = vmatpush1.msra.mxu0 %v944
      %953 = vmatprep.subr.mxu0 0.0
      %954 = vmatpush1.msra.mxu0 %v943
      %955 = vmatprep.subr.mxu0 0.0
      %956 = vmatpush1.msra.mxu0 %v942
      %957 = vmatprep.subr.mxu0 0.0
      %958 = vmatpush1.msra.mxu0 %v941
      %959 = vmatprep.subr.mxu0 0.0
      %960 = vmatpush1.msra.mxu0 %v940
      %961 = vmatprep.subr.mxu0 0.0
      %962 = vmatpush1.msra.mxu0 %v939
      %963 = vmatprep.subr.mxu0 0.0
      %964 = vmatpush1.msra.mxu0 %v938
      %965 = vmatprep.subr.mxu0 0.0
      %966 = vmatpush1.msra.mxu0 %v937
      %967 = vmatprep.subr.mxu0 0.0
      %968 = vmatpush1.msra.mxu0 %v936
      %969 = vmatprep.subr.mxu0 0.0
      %970 = vmatpush1.msra.mxu0 %v935
      %971 = vmatprep.subr.mxu0 0.0
      %972 = vmatpush1.msra.mxu0 %v934
      %973 = vmatprep.subr.mxu0 0.0
      %974 = vmatpush1.msra.mxu0 %v933
      %975 = vmatprep.subr.mxu0 0.0
      %976 = vmatpush1.msra.mxu0 %v932
      %977 = vmatprep.subr.mxu0 0.0
      %978 = vmatpush1.msra.mxu0 %v931
      %979 = vmatprep.subr.mxu0 0.0
      %980 = vmatpush2.msra.mxu0 0.0
      %981 = vmatprep.subr.mxu0 0.0
      %982 = vmatpush2.msra.mxu0 0.0
      %983 = vmatprep.subr.mxu0 0.0
      %984 = vmatpush2.msra.mxu0 0.0
      %985 = vmatprep.subr.mxu0 0.0
      %986 = vmatpush2.msra.mxu0 0.0
      %987 = vmatprep.subr.mxu0 0.0
      %988 = vmatpush2.msra.mxu0 0.0
      %989 = vmatprep.subr.mxu0 0.0
      %990 = vmatpush2.msra.mxu0 0.0
      %991 = vmatprep.subr.mxu0 0.0
      %992 = vmatpush2.msra.mxu0 0.0
      %993 = vmatprep.subr.mxu0 0.0
      %994 = vmatpush2.msra.mxu0 0.0
      %995 = vmatprep.subr.mxu0 0.0
      %996 = vmatpush2.msra.mxu0 0.0
      %997 = vmatprep.subr.mxu0 0.0
      %998 = vmatpush2.msra.mxu0 0.0
      %999 = vmatprep.subr.mxu0 0.0
      %1000 = vmatpush2.msra.mxu0 0.0
      %1001 = vmatprep.subr.mxu0 0.0
      %1002 = vmatpush2.msra.mxu0 0.0
      %1003 = vmatprep.subr.mxu0 0.0
      %1004 = vmatpush2.msra.mxu0 0.0
      %1005 = vmatprep.subr.mxu0 0.0
      %1006 = vmatpush2.msra.mxu0 0.0
      %1007 = vmatprep.subr.mxu0 0.0
      %1008 = vmatpush2.msra.mxu0 0.0
      %1009 = vmatprep.subr.mxu0 0.0
      %1010 = vmatpush2.msra.mxu0 0.0
      %1011 = vmatprep.mubr.f32.mxu0 0.0
      %1012 = vmatmul.mubr.f32.gmra.mxu0 %v745
      %v1013 = vpop.f32.mrf.mxu0
      %v1014 = vadd.f32 0.0, %v1013
      %v1015 = vpop.f32.mrf.mxu0
      %1016 = vmatprep.mubr.f32.mxu0 0.0
      %1017 = vmatmul.mubr.f32.gmra.mxu0 %v746
      %v1018 = vpop.f32.mrf.mxu0
      %v1019 = vadd.f32 0.0, %v1018
      %v1020 = vpop.f32.mrf.mxu0
      %1021 = vdwg.mxu0
      %1022 = vmatprep.subr.mxu0 0.0
      %1023 = vmatpush1.msra.mxu0 0.0
      %1024 = vmatprep.subr.mxu0 0.0
      %1025 = vmatpush1.msra.mxu0 0.0
      %1026 = vmatprep.subr.mxu0 0.0
      %1027 = vmatpush1.msra.mxu0 0.0
      %1028 = vmatprep.subr.mxu0 0.0
      %1029 = vmatpush1.msra.mxu0 0.0
      %1030 = vmatprep.subr.mxu0 0.0
      %1031 = vmatpush1.msra.mxu0 0.0
      %1032 = vmatprep.subr.mxu0 0.0
      %1033 = vmatpush1.msra.mxu0 0.0
      %1034 = vmatprep.subr.mxu0 0.0
      %1035 = vmatpush1.msra.mxu0 0.0
      %1036 = vmatprep.subr.mxu0 0.0
      %1037 = vmatpush1.msra.mxu0 0.0
      %1038 = vmatprep.subr.mxu0 0.0
      %1039 = vmatpush1.msra.mxu0 0.0
      %1040 = vmatprep.subr.mxu0 0.0
      %1041 = vmatpush1.msra.mxu0 0.0
      %1042 = vmatprep.subr.mxu0 0.0
      %1043 = vmatpush1.msra.mxu0 0.0
      %1044 = vmatprep.subr.mxu0 0.0
      %1045 = vmatpush1.msra.mxu0 0.0
      %1046 = vmatprep.subr.mxu0 0.0
      %1047 = vmatpush1.msra.mxu0 0.0
      %1048 = vmatprep.subr.mxu0 0.0
      %1049 = vmatpush1.msra.mxu0 0.0
      %1050 = vmatprep.subr.mxu0 0.0
      %1051 = vmatpush1.msra.mxu0 %v835
      %1052 = vmatprep.subr.mxu0 0.0
      %1053 = vmatpush1.msra.mxu0 %v830
      %1054 = vmatprep.subr.mxu0 0.0
      %1055 = vmatpush2.msra.mxu0 0.0
      %1056 = vmatprep.subr.mxu0 0.0
      %1057 = vmatpush2.msra.mxu0 0.0
      %1058 = vmatprep.subr.mxu0 0.0
      %1059 = vmatpush2.msra.mxu0 0.0
      %1060 = vmatprep.subr.mxu0 0.0
      %1061 = vmatpush2.msra.mxu0 0.0
      %1062 = vmatprep.subr.mxu0 0.0
      %1063 = vmatpush2.msra.mxu0 0.0
      %1064 = vmatprep.subr.mxu0 0.0
      %1065 = vmatpush2.msra.mxu0 0.0
      %1066 = vmatprep.subr.mxu0 0.0
      %1067 = vmatpush2.msra.mxu0 0.0
      %1068 = vmatprep.subr.mxu0 0.0
      %1069 = vmatpush2.msra.mxu0 0.0
      %1070 = vmatprep.subr.mxu0 0.0
      %1071 = vmatpush2.msra.mxu0 0.0
      %1072 = vmatprep.subr.mxu0 0.0
      %1073 = vmatpush2.msra.mxu0 0.0
      %1074 = vmatprep.subr.mxu0 0.0
      %1075 = vmatpush2.msra.mxu0 0.0
      %1076 = vmatprep.subr.mxu0 0.0
      %1077 = vmatpush2.msra.mxu0 0.0
      %1078 = vmatprep.subr.mxu0 0.0
      %1079 = vmatpush2.msra.mxu0 0.0
      %1080 = vmatprep.subr.mxu0 0.0
      %1081 = vmatpush2.msra.mxu0 0.0
      %1082 = vmatprep.subr.mxu0 0.0
      %1083 = vmatpush2.msra.mxu0 0.0
      %1084 = vmatprep.subr.mxu0 0.0
      %1085 = vmatpush2.msra.mxu0 0.0
      %1086 = vmatprep.mubr.f32.mxu0 0.0
      %1087 = vmatmul.mubr.f32.gmra.mxu0 %v573
      %v1088 = vpop.f32.mrf.mxu0
      %v1089 = vadd.f32 %v922, %v1088
      %v1090 = vpop.f32.mrf.mxu0
      %1091 = vmatprep.mubr.f32.mxu0 0.0
      %1092 = vmatmul.mubr.f32.gmra.mxu0 %v576
      %v1093 = vpop.f32.mrf.mxu0
      %v1094 = vadd.f32 %v927, %v1093
      %v1095 = vpop.f32.mrf.mxu0
      %1096 = vdwg.mxu0
      %1097 = vmatprep.subr.mxu0 0.0
      %1098 = vmatpush1.msra.mxu0 0.0
      %1099 = vmatprep.subr.mxu0 0.0
      %1100 = vmatpush1.msra.mxu0 0.0
      %1101 = vmatprep.subr.mxu0 0.0
      %1102 = vmatpush1.msra.mxu0 0.0
      %1103 = vmatprep.subr.mxu0 0.0
      %1104 = vmatpush1.msra.mxu0 0.0
      %1105 = vmatprep.subr.mxu0 0.0
      %1106 = vmatpush1.msra.mxu0 0.0
      %1107 = vmatprep.subr.mxu0 0.0
      %1108 = vmatpush1.msra.mxu0 0.0
      %1109 = vmatprep.subr.mxu0 0.0
      %1110 = vmatpush1.msra.mxu0 0.0
      %1111 = vmatprep.subr.mxu0 0.0
      %1112 = vmatpush1.msra.mxu0 0.0
      %1113 = vmatprep.subr.mxu0 0.0
      %1114 = vmatpush1.msra.mxu0 0.0
      %1115 = vmatprep.subr.mxu0 0.0
      %1116 = vmatpush1.msra.mxu0 0.0
      %1117 = vmatprep.subr.mxu0 0.0
      %1118 = vmatpush1.msra.mxu0 0.0
      %1119 = vmatprep.subr.mxu0 0.0
      %1120 = vmatpush1.msra.mxu0 0.0
      %1121 = vmatprep.subr.mxu0 0.0
      %1122 = vmatpush1.msra.mxu0 0.0
      %1123 = vmatprep.subr.mxu0 0.0
      %1124 = vmatpush1.msra.mxu0 0.0
      %1125 = vmatprep.subr.mxu0 0.0
      %1126 = vmatpush1.msra.mxu0 %v1019
      %1127 = vmatprep.subr.mxu0 0.0
      %1128 = vmatpush1.msra.mxu0 %v1014
      %1129 = vmatprep.subr.mxu0 0.0
      %1130 = vmatpush2.msra.mxu0 0.0
      %1131 = vmatprep.subr.mxu0 0.0
      %1132 = vmatpush2.msra.mxu0 0.0
      %1133 = vmatprep.subr.mxu0 0.0
      %1134 = vmatpush2.msra.mxu0 0.0
      %1135 = vmatprep.subr.mxu0 0.0
      %1136 = vmatpush2.msra.mxu0 0.0
      %1137 = vmatprep.subr.mxu0 0.0
      %1138 = vmatpush2.msra.mxu0 0.0
      %1139 = vmatprep.subr.mxu0 0.0
      %1140 = vmatpush2.msra.mxu0 0.0
      %1141 = vmatprep.subr.mxu0 0.0
      %1142 = vmatpush2.msra.mxu0 0.0
      %1143 = vmatprep.subr.mxu0 0.0
      %1144 = vmatpush2.msra.mxu0 0.0
      %1145 = vmatprep.subr.mxu0 0.0
      %1146 = vmatpush2.msra.mxu0 0.0
      %1147 = vmatprep.subr.mxu0 0.0
      %1148 = vmatpush2.msra.mxu0 0.0
      %1149 = vmatprep.subr.mxu0 0.0
      %1150 = vmatpush2.msra.mxu0 0.0
      %1151 = vmatprep.subr.mxu0 0.0
      %1152 = vmatpush2.msra.mxu0 0.0
      %1153 = vmatprep.subr.mxu0 0.0
      %1154 = vmatpush2.msra.mxu0 0.0
      %1155 = vmatprep.subr.mxu0 0.0
      %1156 = vmatpush2.msra.mxu0 0.0
      %1157 = vmatprep.subr.mxu0 0.0
      %1158 = vmatpush2.msra.mxu0 0.0
      %1159 = vmatprep.subr.mxu0 0.0
      %1160 = vmatpush2.msra.mxu0 0.0
      %1161 = vmatprep.mubr.f32.mxu0 0.0
      %1162 = vmatmul.mubr.f32.gmra.mxu0 %v654
      %v1163 = vpop.f32.mrf.mxu0
      %v1164 = vadd.f32 0.0, %v1163
      %v1165 = vpop.f32.mrf.mxu0
      %1166 = vmatprep.mubr.f32.mxu0 0.0
      %1167 = vmatmul.mubr.f32.gmra.mxu0 %v657
      %v1168 = vpop.f32.mrf.mxu0
      %v1169 = vadd.f32 0.0, %v1168
      %v1170 = vpop.f32.mrf.mxu0
      %1171 = vdwg.mxu0
      %v1172 = vadd.f32 %v1089, %v1164
      %v1173 = vadd.f32 %v1094, %v1169
      %v1174 = vld [vmem:[%s3] sm:$0xff]
      %v1175 = vld [vmem:[%s3 + $0x8] sm:$0xff]
      %v1176 = vld [vmem:[%s3 + $0x10] sm:$0xff]
      %v1177 = vld [vmem:[%s3 + $0x18] sm:$0xff]
      %v1178 = vld [vmem:[%s3 + $0x20] sm:$0xff]
      %v1179 = vld [vmem:[%s3 + $0x28] sm:$0xff]
      %v1180 = vld [vmem:[%s3 + $0x30] sm:$0xff]
      %v1181 = vld [vmem:[%s3 + $0x38] sm:$0xff]
      %1182 = vmatprep.subr.mxu0 0.0
      %1183 = vmatpush1.msra.mxu0 0.0
      %1184 = vmatprep.subr.mxu0 0.0
      %1185 = vmatpush1.msra.mxu0 0.0
      %1186 = vmatprep.subr.mxu0 0.0
      %1187 = vmatpush1.msra.mxu0 0.0
      %1188 = vmatprep.subr.mxu0 0.0
      %1189 = vmatpush1.msra.mxu0 0.0
      %1190 = vmatprep.subr.mxu0 0.0
      %1191 = vmatpush1.msra.mxu0 0.0
      %1192 = vmatprep.subr.mxu0 0.0
      %1193 = vmatpush1.msra.mxu0 0.0
      %1194 = vmatprep.subr.mxu0 0.0
      %1195 = vmatpush1.msra.mxu0 0.0
      %1196 = vmatprep.subr.mxu0 0.0
      %1197 = vmatpush1.msra.mxu0 0.0
      %1198 = vmatprep.subr.mxu0 0.0
      %1199 = vmatpush1.msra.mxu0 %v1181
      %1200 = vmatprep.subr.mxu0 0.0
      %1201 = vmatpush1.msra.mxu0 %v1180
      %1202 = vmatprep.subr.mxu0 0.0
      %1203 = vmatpush1.msra.mxu0 %v1179
      %1204 = vmatprep.subr.mxu0 0.0
      %1205 = vmatpush1.msra.mxu0 %v1178
      %1206 = vmatprep.subr.mxu0 0.0
      %1207 = vmatpush1.msra.mxu0 %v1177
      %1208 = vmatprep.subr.mxu0 0.0
      %1209 = vmatpush1.msra.mxu0 %v1176
      %1210 = vmatprep.subr.mxu0 0.0
      %1211 = vmatpush1.msra.mxu0 %v1175
      %1212 = vmatprep.subr.mxu0 0.0
      %1213 = vmatpush1.msra.mxu0 %v1174
      %1214 = vmatprep.subr.mxu0 0.0
      %1215 = vmatpush2.msra.mxu0 0.0
      %1216 = vmatprep.subr.mxu0 0.0
      %1217 = vmatpush2.msra.mxu0 0.0
      %1218 = vmatprep.subr.mxu0 0.0
      %1219 = vmatpush2.msra.mxu0 0.0
      %1220 = vmatprep.subr.mxu0 0.0
      %1221 = vmatpush2.msra.mxu0 0.0
      %1222 = vmatprep.subr.mxu0 0.0
      %1223 = vmatpush2.msra.mxu0 0.0
      %1224 = vmatprep.subr.mxu0 0.0
      %1225 = vmatpush2.msra.mxu0 0.0
      %1226 = vmatprep.subr.mxu0 0.0
      %1227 = vmatpush2.msra.mxu0 0.0
      %1228 = vmatprep.subr.mxu0 0.0
      %1229 = vmatpush2.msra.mxu0 0.0
      %1230 = vmatprep.subr.mxu0 0.0
      %1231 = vmatpush2.msra.mxu0 0.0
      %1232 = vmatprep.subr.mxu0 0.0
      %1233 = vmatpush2.msra.mxu0 0.0
      %1234 = vmatprep.subr.mxu0 0.0
      %1235 = vmatpush2.msra.mxu0 0.0
      %1236 = vmatprep.subr.mxu0 0.0
      %1237 = vmatpush2.msra.mxu0 0.0
      %1238 = vmatprep.subr.mxu0 0.0
      %1239 = vmatpush2.msra.mxu0 0.0
      %1240 = vmatprep.subr.mxu0 0.0
      %1241 = vmatpush2.msra.mxu0 0.0
      %1242 = vmatprep.subr.mxu0 0.0
      %1243 = vmatpush2.msra.mxu0 0.0
      %1244 = vmatprep.subr.mxu0 0.0
      %1245 = vmatpush2.msra.mxu0 0.0
      %1246 = vmatprep.mubr.f32.mxu0 0.0
      %1247 = vmatmul.mubr.f32.gmra.mxu0 %v323
      %v1248 = vpop.f32.mrf.mxu0
      %v1249 = vadd.f32 0.0, %v1248
      %v1250 = vpop.f32.mrf.mxu0
      %1251 = vmatprep.mubr.f32.mxu0 0.0
      %1252 = vmatmul.mubr.f32.gmra.mxu0 %v326
      %v1253 = vpop.f32.mrf.mxu0
      %v1254 = vadd.f32 0.0, %v1253
      %v1255 = vpop.f32.mrf.mxu0
      %1256 = vdwg.mxu0
      %v1257 = vadd.f32 %v1172, %v1249
      %v1258 = vadd.f32 %v1173, %v1254
      %v1259 = vld [vmem:[%s7] sm:$0x1]
      %v1261 = vlaneseq
      %v1262 = vshrl.u32 %v1261, 7
      %v1263 = vsub.s32 0, %v1262
      %v1264 = vrot.slane %v1259, %v1263
      %v1266 = vadd.f32 %v1257, %v1264
      %v1267 = vadd.f32 %v1258, %v1264
      %1268 = vst [vmem:[%s305] sm:$0xff] %v1266
      %1269 = vst [vmem:[%s305 + $0x8] sm:$0xff] %v1267
      %s1270 = smul.u32 2, %s19
      %p1271 = scmp.lt.s32.totalorder %s1270, 3
      %s1272 = scalar_select %p1271, %s1270, 3
      %s1273 = smul.addr %s1272, 8
      %s1274 = scalar_lea.vmem %s8, %s1273
      // Predicated region
      $region53: #{block_forward.1} parent=51 // pred_check
        %p1275 = pneg %p210
      $region54: #{block_forward.1} parent=51 // pred_check_branch
        %1277 = sbr.rel (%p1275) target = $region56
      $region55: #{block_forward.1} parent=51 // pred_region
        %s1278 = smul.u32 2, %s19
      $region56: #{block_forward.1} parent=51 // pred_fallthru
        _
    $region52: #{block_forward.1} parent=5 // pred_fallthru
      _
    %p1279 = scmp.le.s32.totalorder 2, %s14
    // Predicated region
    $region57: #{block_forward.1} parent=5 // pred_check
      %p1280 = pneg %p1279
    $region58: #{block_forward.1} parent=5 // pred_check_branch
      %1282 = sbr.rel (%p1280) target = $region60
    $region59: #{block_forward.1} parent=5 // pred_region
      %s1283 = ssub.s32 %s14, 2
      // Predicated region
      $region61: #{block_forward.1} parent=59 // pred_check
        %p1284 = pneg %p216
      $region62: #{block_forward.1} parent=59 // pred_check_branch
        %1286 = sbr.rel (%p1284) target = $region64
      $region63: #{block_forward.1} parent=59 // pred_region
        %s1287 = smul.u32 2, %s20
        %p1288 = scmp.lt.s32.totalorder %s1287, 3
        %s1289 = scalar_select %p1288, %s1287, 3
        %s1290 = smul.addr %s1289, 8
        %s1291 = scalar_lea.vmem %s8, %s1290
      $region64: #{block_forward.1} parent=59 // pred_fallthru
        _
    $region60: #{block_forward.1} parent=5 // pred_fallthru
      _
  $region6: #{block_forward.1} parent=0 // loop_footer
    %s18 = sadd.s32 1, %s14
  $region7: #{block_forward.1} parent=0 // loop_footer_branch
    %13 = sbr.rel target = $region3
  $region8: #{block_forward.1} parent=0 // loop_exit
    _

</llo_original>
